<compile_context>
chip_gen: v6e
topology: v6e:2x2x1
jax: 0.10.0
libtpu: 0.0.40
codegen_flags: <defaults>
</compile_context>

<pallas_src>
import jax
import jax.numpy as jnp
from jax.experimental import pallas as pl
from jax.experimental.pallas import tpu as pltpu

HIDDEN = 768        # BERT pooled output size
FC1 = 512
NUM_CLASSES = 2
PAD_CLASSES = 128   # lane-dense padded class dimension
NEG_BIG = -1.0e30   # bias for padded (fake) classes -> exp() underflows to 0


def _head_kernel(x_ref, w1_ref, b1_ref, w2_ref, b2_ref, o_ref):
    # x:  [TB, 768] f32/bf16 (cast to bf16 here; hidden under the fc1 matmul)
    # w1: [768, 512] bf16    b1: [1, 512] f32
    # w2: [512, 128] bf16    b2: [1, 128] f32
    # o:  [TB, 128] bf16 (lane-dense padded class dim)
    x = x_ref[...].astype(jnp.bfloat16)

    # fc1 (bf16 MXU inputs, f32 accumulation) + bias + ReLU, all f32 math.
    h = jnp.dot(x, w1_ref[...], preferred_element_type=jnp.float32) + b1_ref[...]
    h = jnp.maximum(h, 0.0)
    # TODO(synk): nn.Dropout(0.1) training-mode masking not implemented (eval = identity).

    # fc2 on the lane-padded class dim (padded cols: w=0, b=-1e30 -> prob 0).
    logits = jnp.dot(h.astype(jnp.bfloat16), w2_ref[...],
                     preferred_element_type=jnp.float32) + b2_ref[...]

    # LogSoftmax(dim=1): padded columns contribute exp(~-1e30) == 0 to the sum,
    # so the real 2 columns match an unpadded log-softmax exactly.
    m = jnp.max(logits, axis=-1, keepdims=True)
    shifted = logits - m
    lse = jnp.log(jnp.sum(jnp.exp(shifted), axis=-1, keepdims=True))
    o_ref[...] = (shifted - lse).astype(o_ref.dtype)


def prepare_head_params(w1, b1, w2, b2):
    """One-time weight preparation (hoisted out of the per-call path).

    Returns device arrays already cast / padded for the kernel:
      w1: [768,512] bf16, b1: [1,512] f32, w2: [512,128] bf16 (class-padded),
      b2: [1,128] f32 (padded classes biased to -1e30).
    """
    w1_bf16 = w1.astype(jnp.bfloat16)
    b1_2d = b1.reshape(1, FC1).astype(jnp.float32)
    w2_pad = jnp.zeros((FC1, PAD_CLASSES), jnp.bfloat16).at[:, :NUM_CLASSES].set(
        w2.astype(jnp.bfloat16))
    b2_pad = jnp.full((1, PAD_CLASSES), NEG_BIG, jnp.float32).at[:, :NUM_CLASSES].set(
        b2.reshape(1, NUM_CLASSES).astype(jnp.float32))
    return (w1_bf16, b1_2d, w2_pad, b2_pad)


def _round_up(x, m):
    return ((x + m - 1) // m) * m


def bert_arch_head(cls_hs, params, *, batch_tile=1024):
    """Pallas implementation of BERT_Arch.forward after the bert() call.

    `params` must come from prepare_head_params() (called once, not per step).
    """
    w1_bf16, b1_2d, w2_pad, b2_pad = params
    B = cls_hs.shape[0]

    # Batch tile:
    #  * small batch -> single full-array tile (exempt from (8,128) rule);
    #  * large batch -> big tiles (up to 1024 rows) to amortize the ~0.35us
    #    per-grid-step overhead, but capped at ceil(B/2) (rounded to 16) so
    #    there are always >=2 grid steps for v7x's two TensorCores.
    if B <= 128:
        tb = B
    else:
        tb = min(batch_tile, _round_up(pl.cdiv(B, 2), 16))
    grid = (pl.cdiv(B, tb),)

    x_bytes = cls_hs.size * cls_hs.dtype.itemsize
    cost = pl.CostEstimate(
        flops=2 * B * HIDDEN * FC1 + 2 * B * FC1 * PAD_CLASSES,
        transcendentals=B * (PAD_CLASSES + 1),  # exp per lane + log per row
        bytes_accessed=(x_bytes + w1_bf16.size * 2 + b1_2d.size * 4
                        + w2_pad.size * 2 + b2_pad.size * 4
                        + B * PAD_CLASSES * 2),
    )

    out_pad = pl.pallas_call(
        _head_kernel,
        out_shape=jax.ShapeDtypeStruct((B, PAD_CLASSES), jnp.bfloat16),
        grid=grid,
        in_specs=[
            # x: tiled over batch. If x DMA shows exposed on v6e profiles,
            # add pipeline_mode=pl.Buffered(3) here (one extra x tile of VMEM).
            pl.BlockSpec((tb, HIDDEN), lambda i: (i, 0)),
            pl.BlockSpec((HIDDEN, FC1), lambda i: (0, 0)),         # w1: VMEM-resident
            pl.BlockSpec((1, FC1), lambda i: (0, 0)),              # b1: VMEM-resident
            pl.BlockSpec((FC1, PAD_CLASSES), lambda i: (0, 0)),    # w2: VMEM-resident
            pl.BlockSpec((1, PAD_CLASSES), lambda i: (0, 0)),      # b2: VMEM-resident
        ],
        out_specs=pl.BlockSpec((tb, PAD_CLASSES), lambda i: (i, 0)),
        compiler_params=pltpu.CompilerParams(
            dimension_semantics=("parallel",),
            vmem_limit_bytes=32 << 20,
        ),
        cost_estimate=cost,
    )(cls_hs, w1_bf16, b1_2d, w2_pad, b2_pad)

    # Drop the padded lanes; only the 2 real classes are returned (f32, to
    # match the PyTorch module's output dtype).
    return out_pad[:, :NUM_CLASSES].astype(jnp.float32)


def _init_linear(key, fan_in, fan_out):
    # Deterministic init mimicking nn.Linear default: U(-1/sqrt(fan_in), +1/sqrt(fan_in))
    kw, kb = jax.random.split(key)
    bound = 1.0 / jnp.sqrt(float(fan_in))
    w = jax.random.uniform(kw, (fan_in, fan_out), jnp.float32, -bound, bound)
    b = jax.random.uniform(kb, (fan_out,), jnp.float32, -bound, bound)
    return w, b


if __name__ == "__main__":
    key = jax.random.PRNGKey(0)
    k_x, k_fc1, k_fc2 = jax.random.split(key, 3)

    B = 2  # small batch
    # Stand-in for the BERT pooled [CLS] hidden state.
    cls_hs = jax.random.normal(k_x, (B, HIDDEN), jnp.float32)

    w1, b1 = _init_linear(k_fc1, HIDDEN, FC1)
    w2, b2 = _init_linear(k_fc2, FC1, NUM_CLASSES)

    # One-time weight prep (hoisted out of the per-call path).
    params = jax.block_until_ready(prepare_head_params(w1, b1, w2, b2))

    out = bert_arch_head(cls_hs, params)
    out = jax.block_until_ready(out)

    # Sanity check against a plain-JAX reference using the same bf16-in /
    # f32-acc mixed precision as the kernel (kernel output is additionally
    # rounded to bf16 on store, hence the slightly loose tolerance).
    xb = cls_hs.astype(jnp.bfloat16)
    w1b = w1.astype(jnp.bfloat16)
    h_ref = jnp.maximum(
        jnp.dot(xb, w1b, preferred_element_type=jnp.float32) + b1, 0.0)
    logits_ref = jnp.dot(h_ref.astype(jnp.bfloat16), w2.astype(jnp.bfloat16),
                         preferred_element_type=jnp.float32) + b2
    ref = jax.nn.log_softmax(logits_ref, axis=1)

    assert out.shape == (B, NUM_CLASSES)
    assert out.dtype == jnp.float32
    assert jnp.allclose(out, ref, atol=3e-2, rtol=3e-2), (out, ref)

    print("KERNEL_OK")
</pallas_src>

<mosaic_0001>
module attributes {stable_mosaic.version = 11 : i64} {
  func.func @_head_kernel(%arg0: i32, %arg1: memref<2x768xf32, #tpu.memory_space<vmem>>, %arg2: memref<768x512xbf16, #tpu.memory_space<vmem>>, %arg3: memref<1x512xf32, #tpu.memory_space<vmem>>, %arg4: memref<512x128xbf16, #tpu.memory_space<vmem>>, %arg5: memref<1x128xf32, #tpu.memory_space<vmem>>, %arg6: memref<2x128xbf16, #tpu.memory_space<vmem>>) attributes {dimension_semantics = [#tpu.dimension_semantics<parallel>], iteration_bounds = array<i64: 1>, scalar_prefetch = 0 : i64, scratch_operands = 0 : i64, tpu.core_type = #tpu.core_type<tc>, window_params = [{transform_indices = @transform_0, window_bounds = array<i64: 2, 768>}, {pipeline_mode = #tpu.pipeline_mode<synchronous>, transform_indices = @transform_1, window_bounds = array<i64: 768, 512>}, {pipeline_mode = #tpu.pipeline_mode<synchronous>, transform_indices = @transform_2, window_bounds = array<i64: 1, 512>}, {pipeline_mode = #tpu.pipeline_mode<synchronous>, transform_indices = @transform_3, window_bounds = array<i64: 512, 128>}, {pipeline_mode = #tpu.pipeline_mode<synchronous>, transform_indices = @transform_4, window_bounds = array<i64: 1, 128>}, {transform_indices = @transform_5, window_bounds = array<i64: 2, 128>}]} {
    %c0 = arith.constant 0 : index
    %c0_0 = arith.constant 0 : index
    %0 = vector.load %arg1[%c0, %c0_0] : memref<2x768xf32, #tpu.memory_space<vmem>>, vector<2x768xf32>
    %1 = arith.truncf %0 : vector<2x768xf32> to vector<2x768xbf16>
    %c0_1 = arith.constant 0 : index
    %c0_2 = arith.constant 0 : index
    %2 = vector.load %arg2[%c0_1, %c0_2] : memref<768x512xbf16, #tpu.memory_space<vmem>>, vector<768x512xbf16>
    %cst = arith.constant dense<0.000000e+00> : vector<2x512xf32>
    %3 = tpu.matmul %1, %2, %cst {dimension_numbers = #tpu.dot_dimension_numbers<[1], [0], [0], [1], [0, 0, 1, 1], [], []>} : vector<2x768xbf16>, vector<768x512xbf16>, vector<2x512xf32> -> vector<2x512xf32>
    %c0_3 = arith.constant 0 : index
    %c0_4 = arith.constant 0 : index
    %4 = vector.load %arg3[%c0_3, %c0_4] : memref<1x512xf32, #tpu.memory_space<vmem>>, vector<1x512xf32>
    %5 = vector.broadcast %4 : vector<1x512xf32> to vector<2x512xf32>
    %6 = arith.addf %3, %5 : vector<2x512xf32>
    %cst_5 = arith.constant 0.000000e+00 : f32
    %7 = vector.broadcast %cst_5 : f32 to vector<2x512xf32>
    %8 = arith.maximumf %6, %7 : vector<2x512xf32>
    %9 = arith.truncf %8 : vector<2x512xf32> to vector<2x512xbf16>
    %c0_6 = arith.constant 0 : index
    %c0_7 = arith.constant 0 : index
    %10 = vector.load %arg4[%c0_6, %c0_7] : memref<512x128xbf16, #tpu.memory_space<vmem>>, vector<512x128xbf16>
    %cst_8 = arith.constant dense<0.000000e+00> : vector<2x128xf32>
    %11 = tpu.matmul %9, %10, %cst_8 {dimension_numbers = #tpu.dot_dimension_numbers<[1], [0], [0], [1], [0, 0, 1, 1], [], []>} : vector<2x512xbf16>, vector<512x128xbf16>, vector<2x128xf32> -> vector<2x128xf32>
    %c0_9 = arith.constant 0 : index
    %c0_10 = arith.constant 0 : index
    %12 = vector.load %arg5[%c0_9, %c0_10] : memref<1x128xf32, #tpu.memory_space<vmem>>, vector<1x128xf32>
    %13 = vector.broadcast %12 : vector<1x128xf32> to vector<2x128xf32>
    %14 = arith.addf %11, %13 : vector<2x128xf32>
    %cst_11 = arith.constant dense<0xFF800000> : vector<2xf32>
    %15 = vector.multi_reduction <maximumf>, %14, %cst_11 [1] : vector<2x128xf32> to vector<2xf32>
    %16 = vector.shape_cast %15 : vector<2xf32> to vector<2x1xf32>
    %17 = vector.broadcast %16 : vector<2x1xf32> to vector<2x128xf32>
    %18 = arith.subf %14, %17 : vector<2x128xf32>
    %19 = math.exp %18 : vector<2x128xf32>
    %cst_12 = arith.constant dense<0.000000e+00> : vector<2xf32>
    %20 = vector.multi_reduction <add>, %19, %cst_12 [1] : vector<2x128xf32> to vector<2xf32>
    %21 = vector.shape_cast %20 : vector<2xf32> to vector<2x1xf32>
    %22 = math.log %21 : vector<2x1xf32>
    %23 = vector.broadcast %22 : vector<2x1xf32> to vector<2x128xf32>
    %24 = arith.subf %18, %23 : vector<2x128xf32>
    %25 = arith.truncf %24 : vector<2x128xf32> to vector<2x128xbf16>
    %c0_13 = arith.constant 0 : index
    %c0_14 = arith.constant 0 : index
    %26 = vector.load %arg6[%c0_13, %c0_14] : memref<2x128xbf16, #tpu.memory_space<vmem>>, vector<2x128xbf16>
    tpu.vector_store %arg6[%c0_13, %c0_14], %25 {strides = array<i32>} : memref<2x128xbf16, #tpu.memory_space<vmem>>, vector<2x128xbf16>,
    return
  }
  func.func @transform_0(%arg0: i32) -> (i32, i32) {
    %c0_i32 = arith.constant 0 : i32
    %c0_i32_0 = arith.constant 0 : i32
    return %arg0, %c0_i32 : i32, i32
  }
  func.func @transform_1(%arg0: i32) -> (i32, i32) {
    %c0_i32 = arith.constant 0 : i32
    %c0_i32_0 = arith.constant 0 : i32
    %c0_i32_1 = arith.constant 0 : i32
    return %c0_i32, %c0_i32_0 : i32, i32
  }
  func.func @transform_2(%arg0: i32) -> (i32, i32) {
    %c0_i32 = arith.constant 0 : i32
    %c0_i32_0 = arith.constant 0 : i32
    %c0_i32_1 = arith.constant 0 : i32
    return %c0_i32, %c0_i32_0 : i32, i32
  }
  func.func @transform_3(%arg0: i32) -> (i32, i32) {
    %c0_i32 = arith.constant 0 : i32
    %c0_i32_0 = arith.constant 0 : i32
    %c0_i32_1 = arith.constant 0 : i32
    return %c0_i32, %c0_i32_0 : i32, i32
  }
  func.func @transform_4(%arg0: i32) -> (i32, i32) {
    %c0_i32 = arith.constant 0 : i32
    %c0_i32_0 = arith.constant 0 : i32
    %c0_i32_1 = arith.constant 0 : i32
    return %c0_i32, %c0_i32_0 : i32, i32
  }
  func.func @transform_5(%arg0: i32) -> (i32, i32) {
    %c0_i32 = arith.constant 0 : i32
    %c0_i32_0 = arith.constant 0 : i32
    return %arg0, %c0_i32 : i32, i32
  }
}

</mosaic_0001>

<llo_original>
// kernel: tpu_custom_call.1
$region0: #{tpu_custom_call.1}
  #allocation0 [shape = 'u32[]', space=smem, size = 0x4, offset = 0x4, fixed_abs, tag = 'smem constant byte address 0x4 - core index']
  #allocation1 [shape = 'u32[144,128]{1,0:T(1,128)}', space=vmem, size = 0x12000, scoped, tag = 'internal scratch']
  %s0 = inlined_call_operand.hbm [shape: f32[2,768], index: 0, kind: input, shape index: {}]
  %s1 = inlined_call_operand.hbm [shape: bf16[768,512], index: 1, kind: input, shape index: {}]
  %s2 = inlined_call_operand.hbm [shape: f32[1,512], index: 2, kind: input, shape index: {}]
  %s3 = inlined_call_operand.hbm [shape: bf16[512,128], index: 3, kind: input, shape index: {}]
  %s4 = inlined_call_operand.vmem [shape: f32[1,128], index: 4, kind: input, shape index: {}]
  %s5 = inlined_call_operand.hbm [shape: bf16[2,128], index: 5, kind: output, shape index: {}]
  %s6 = sld [smem:[#allocation0]]
  $region46: #{tpu_custom_call.1} parent=0
    _
  %s8 = ssub.s32 1, %s6
  %s9 = scalar_select 0, %s8, %s6
  $region1: #{tpu_custom_call.1} parent=0
    #allocation2 [shape = 'u8[6144]{0}', space=vmem, size = 0x1800, scoped, tag = 'input window, operand 0, single buffered']
    #allocation3 [shape = 's32[1]{0}', space=sflag, size = 0x4, scoped, tag = 'scoped memory for tpu_custom_call.1']
    #allocation4 [shape = 's32[1]{0}', space=sflag, size = 0x4, scoped, tag = 'scoped memory for tpu_custom_call.1']
    #allocation5 [shape = 'u8[786432]{0}', space=vmem, size = 0xc0000, scoped, tag = 'input window, operand 1, single buffered']
    #allocation6 [shape = 's32[1]{0}', space=sflag, size = 0x4, scoped, tag = 'scoped memory for tpu_custom_call.1']
    #allocation7 [shape = 'u8[2048]{0}', space=vmem, size = 0x800, scoped, tag = 'input window, operand 2, single buffered']
    #allocation8 [shape = 'u8[131072]{0}', space=vmem, size = 0x20000, scoped, tag = 'input window, operand 3, single buffered']
    #allocation9 [shape = 's32[1]{0}', space=sflag, size = 0x4, scoped, tag = 'scoped memory for tpu_custom_call.1']
    #allocation10 [shape = 'u8[512]{0}', space=vmem, size = 0x400, scoped, tag = 'output window, operand 0, single buffered']
    %10 = vsyncpa [#allocation3], 0
    %11 = vsyncpa [#allocation6], 0
    %12 = vsyncpa [#allocation9], 0
    %13 = vsyncpa [#allocation4], 0
    // Predicated region
    $region2: #{tpu_custom_call.1} parent=1 // pred_check
      _
    $region3: #{tpu_custom_call.1} parent=1 // pred_check_branch
      %15 = sbr.rel (0) target = $region5
    $region4: #{tpu_custom_call.1} parent=1 // pred_region
      %s17 = ssub.s32 192, 192
      %18 = vsyncadd [#allocation3], %s17
      %s20 = sshll.u32 [#allocation2], 4
      %s21 = int_to_ptr.vmem [resolvable:$true] %s20
      %23 = dma.hbm_to_vmem [thread:$0]  %s0, 192, %s21, [#allocation3]
    $region5: #{tpu_custom_call.1} parent=1 // pred_fallthru
      _
    // Predicated region
    $region6: #{tpu_custom_call.1} parent=1 // pred_check
      _
    $region7: #{tpu_custom_call.1} parent=1 // pred_check_branch
      %25 = sbr.rel (0) target = $region9
    $region8: #{tpu_custom_call.1} parent=1 // pred_region
      %s27 = ssub.s32 24576, 24576
      %28 = vsyncadd [#allocation6], %s27
      %s29 = sshll.u32 [#allocation5], 4
      %s30 = int_to_ptr.vmem [resolvable:$true] %s29
      %35 = dma.hbm_to_vmem [thread:$0]  %s1, 24576, %s30, [#allocation6], 256, 256, 16
    $region9: #{tpu_custom_call.1} parent=1 // pred_fallthru
      _
    // Predicated region
    $region10: #{tpu_custom_call.1} parent=1 // pred_check
      _
    $region11: #{tpu_custom_call.1} parent=1 // pred_check_branch
      %37 = sbr.rel (0) target = $region13
    $region12: #{tpu_custom_call.1} parent=1 // pred_region
      %s39 = ssub.s32 64, 64
      %40 = vsyncadd [#allocation6], %s39
      %s42 = sshll.u32 [#allocation7], 4
      %s43 = int_to_ptr.vmem [resolvable:$true] %s42
      %45 = dma.hbm_to_vmem [thread:$0]  %s2, 64, %s43, [#allocation6]
    $region13: #{tpu_custom_call.1} parent=1 // pred_fallthru
      _
    // Predicated region
    $region14: #{tpu_custom_call.1} parent=1 // pred_check
      _
    $region15: #{tpu_custom_call.1} parent=1 // pred_check_branch
      %47 = sbr.rel (0) target = $region17
    $region16: #{tpu_custom_call.1} parent=1 // pred_region
      %s49 = ssub.s32 4096, 4096
      %50 = vsyncadd [#allocation9], %s49
      %s51 = sshll.u32 [#allocation8], 4
      %s52 = int_to_ptr.vmem [resolvable:$true] %s51
      %57 = dma.hbm_to_vmem [thread:$0]  %s3, 4096, %s52, [#allocation9], 64, 64, 4
    $region17: #{tpu_custom_call.1} parent=1 // pred_fallthru
      _
    // Predicated region
    $region18: #{tpu_custom_call.1} parent=1 // pred_check
      _
    $region19: #{tpu_custom_call.1} parent=1 // pred_check_branch
      %59 = sbr.rel (0) target = $region21
    $region20: #{tpu_custom_call.1} parent=1 // pred_region
      _
    $region21: #{tpu_custom_call.1} parent=1 // pred_fallthru
      _
    // Predicated region
    $region22: #{tpu_custom_call.1} parent=1 // pred_check
      _
    $region23: #{tpu_custom_call.1} parent=1 // pred_check_branch
      %61 = sbr.rel (0) target = $region25
    $region24: #{tpu_custom_call.1} parent=1 // pred_region
      %62 = dma.done [#allocation3], 192
    $region25: #{tpu_custom_call.1} parent=1 // pred_fallthru
      _
    // Predicated region
    $region26: #{tpu_custom_call.1} parent=1 // pred_check
      _
    $region27: #{tpu_custom_call.1} parent=1 // pred_check_branch
      %64 = sbr.rel (0) target = $region29
    $region28: #{tpu_custom_call.1} parent=1 // pred_region
      %65 = dma.done [#allocation6], 24576
    $region29: #{tpu_custom_call.1} parent=1 // pred_fallthru
      _
    // Predicated region
    $region30: #{tpu_custom_call.1} parent=1 // pred_check
      _
    $region31: #{tpu_custom_call.1} parent=1 // pred_check_branch
      %67 = sbr.rel (0) target = $region33
    $region32: #{tpu_custom_call.1} parent=1 // pred_region
      %68 = dma.done [#allocation6], 64
    $region33: #{tpu_custom_call.1} parent=1 // pred_fallthru
      _
    // Predicated region
    $region34: #{tpu_custom_call.1} parent=1 // pred_check
      _
    $region35: #{tpu_custom_call.1} parent=1 // pred_check_branch
      %70 = sbr.rel (0) target = $region37
    $region36: #{tpu_custom_call.1} parent=1 // pred_region
      %71 = dma.done [#allocation9], 4096
    $region37: #{tpu_custom_call.1} parent=1 // pred_fallthru
      _
    %v73 = vld [vmem:[#allocation2] sm:$0xff]
    %v74 = vld [vmem:[#allocation2 + $0x8] sm:$0xf]
    %v77 = vcombine.high %v73, %v73
    %v79 = vunpack.c.l.s4 1983009808
    %v80 = vunpack.c.0.s8 %v79
    %v81 = vlaneseq
    %v82 = vshrl.u32 %v81, 7
    %v83 = vsub.s32 %v80, %v82
    %v84 = vrot.slane %v73, %v83
    %v86 = vunpack.c.l.s4 1983009808
    %v87 = vunpack.c.0.s8 %v86
    %v88 = vlaneseq
    %v89 = vshrl.u32 %v88, 7
    %v90 = vsub.s32 %v87, %v89
    %v91 = vrot.slane %v77, %v90
    %v92 = vcombine.high %v84, %v84
    %v93 = vcombine.high %v91, %v91
    %v95 = vunpack.c.l.s4 1983009808
    %v96 = vunpack.c.0.s8 %v95
    %v97 = vlaneseq
    %v98 = vshrl.u32 %v97, 7
    %v99 = vsub.s32 %v96, %v98
    %v100 = vrot.slane %v74, %v99
    %v101 = vcombine.high %v100, %v100
    %v108 = vpack.c.bf16 %v84, %v84
    %v109 = vpack.c.bf16 %v92, %v92
    %v110 = vpack.c.bf16 %v91, %v91
    %v111 = vpack.c.bf16 %v93, %v93
    %v112 = vpack.c.bf16 %v100, %v100
    %v113 = vpack.c.bf16 %v101, %v101
    %v114 = vld [vmem:[#allocation5] sm:$0xff]
    %v115 = vld [vmem:[#allocation5 + $0x8] sm:$0xff]
    %v116 = vld [vmem:[#allocation5 + $0x10] sm:$0xff]
    %v117 = vld [vmem:[#allocation5 + $0x18] sm:$0xff]
    %v118 = vld [vmem:[#allocation5 + $0x20] sm:$0xff]
    %v119 = vld [vmem:[#allocation5 + $0x28] sm:$0xff]
    %v120 = vld [vmem:[#allocation5 + $0x30] sm:$0xff]
    %v121 = vld [vmem:[#allocation5 + $0x38] sm:$0xff]
    %v122 = vld [vmem:[#allocation5 + $0x40] sm:$0xff]
    %v123 = vld [vmem:[#allocation5 + $0x48] sm:$0xff]
    %v124 = vld [vmem:[#allocation5 + $0x50] sm:$0xff]
    %v125 = vld [vmem:[#allocation5 + $0x58] sm:$0xff]
    %v126 = vld [vmem:[#allocation5 + $0x60] sm:$0xff]
    %v127 = vld [vmem:[#allocation5 + $0x68] sm:$0xff]
    %v128 = vld [vmem:[#allocation5 + $0x70] sm:$0xff]
    %v129 = vld [vmem:[#allocation5 + $0x78] sm:$0xff]
    %v130 = vld [vmem:[#allocation5 + $0x80] sm:$0xff]
    %v131 = vld [vmem:[#allocation5 + $0x88] sm:$0xff]
    %v132 = vld [vmem:[#allocation5 + $0x90] sm:$0xff]
    %v133 = vld [vmem:[#allocation5 + $0x98] sm:$0xff]
    %v134 = vld [vmem:[#allocation5 + $0xa0] sm:$0xff]
    %v135 = vld [vmem:[#allocation5 + $0xa8] sm:$0xff]
    %v136 = vld [vmem:[#allocation5 + $0xb0] sm:$0xff]
    %v137 = vld [vmem:[#allocation5 + $0xb8] sm:$0xff]
    %v138 = vld [vmem:[#allocation5 + $0xc0] sm:$0xff]
    %v139 = vld [vmem:[#allocation5 + $0xc8] sm:$0xff]
    %v140 = vld [vmem:[#allocation5 + $0xd0] sm:$0xff]
    %v141 = vld [vmem:[#allocation5 + $0xd8] sm:$0xff]
    %v142 = vld [vmem:[#allocation5 + $0xe0] sm:$0xff]
    %v143 = vld [vmem:[#allocation5 + $0xe8] sm:$0xff]
    %v144 = vld [vmem:[#allocation5 + $0xf0] sm:$0xff]
    %v145 = vld [vmem:[#allocation5 + $0xf8] sm:$0xff]
    %v146 = vld [vmem:[#allocation5 + $0x100] sm:$0xff]
    %v147 = vld [vmem:[#allocation5 + $0x108] sm:$0xff]
    %v148 = vld [vmem:[#allocation5 + $0x110] sm:$0xff]
    %v149 = vld [vmem:[#allocation5 + $0x118] sm:$0xff]
    %v150 = vld [vmem:[#allocation5 + $0x120] sm:$0xff]
    %v151 = vld [vmem:[#allocation5 + $0x128] sm:$0xff]
    %v152 = vld [vmem:[#allocation5 + $0x130] sm:$0xff]
    %v153 = vld [vmem:[#allocation5 + $0x138] sm:$0xff]
    %v154 = vld [vmem:[#allocation5 + $0x140] sm:$0xff]
    %v155 = vld [vmem:[#allocation5 + $0x148] sm:$0xff]
    %v156 = vld [vmem:[#allocation5 + $0x150] sm:$0xff]
    %v157 = vld [vmem:[#allocation5 + $0x158] sm:$0xff]
    %v158 = vld [vmem:[#allocation5 + $0x160] sm:$0xff]
    %v159 = vld [vmem:[#allocation5 + $0x168] sm:$0xff]
    %v160 = vld [vmem:[#allocation5 + $0x170] sm:$0xff]
    %v161 = vld [vmem:[#allocation5 + $0x178] sm:$0xff]
    %v162 = vld [vmem:[#allocation5 + $0x180] sm:$0xff]
    %v163 = vld [vmem:[#allocation5 + $0x188] sm:$0xff]
    %v164 = vld [vmem:[#allocation5 + $0x190] sm:$0xff]
    %v165 = vld [vmem:[#allocation5 + $0x198] sm:$0xff]
    %v166 = vld [vmem:[#allocation5 + $0x1a0] sm:$0xff]
    %v167 = vld [vmem:[#allocation5 + $0x1a8] sm:$0xff]
    %v168 = vld [vmem:[#allocation5 + $0x1b0] sm:$0xff]
    %v169 = vld [vmem:[#allocation5 + $0x1b8] sm:$0xff]
    %v170 = vld [vmem:[#allocation5 + $0x1c0] sm:$0xff]
    %v171 = vld [vmem:[#allocation5 + $0x1c8] sm:$0xff]
    %v172 = vld [vmem:[#allocation5 + $0x1d0] sm:$0xff]
    %v173 = vld [vmem:[#allocation5 + $0x1d8] sm:$0xff]
    %v174 = vld [vmem:[#allocation5 + $0x1e0] sm:$0xff]
    %v175 = vld [vmem:[#allocation5 + $0x1e8] sm:$0xff]
    %v176 = vld [vmem:[#allocation5 + $0x1f0] sm:$0xff]
    %v177 = vld [vmem:[#allocation5 + $0x1f8] sm:$0xff]
    %v178 = vld [vmem:[#allocation5 + $0x200] sm:$0xff]
    %v179 = vld [vmem:[#allocation5 + $0x208] sm:$0xff]
    %v180 = vld [vmem:[#allocation5 + $0x210] sm:$0xff]
    %v181 = vld [vmem:[#allocation5 + $0x218] sm:$0xff]
    %v182 = vld [vmem:[#allocation5 + $0x220] sm:$0xff]
    %v183 = vld [vmem:[#allocation5 + $0x228] sm:$0xff]
    %v184 = vld [vmem:[#allocation5 + $0x230] sm:$0xff]
    %v185 = vld [vmem:[#allocation5 + $0x238] sm:$0xff]
    %v186 = vld [vmem:[#allocation5 + $0x240] sm:$0xff]
    %v187 = vld [vmem:[#allocation5 + $0x248] sm:$0xff]
    %v188 = vld [vmem:[#allocation5 + $0x250] sm:$0xff]
    %v189 = vld [vmem:[#allocation5 + $0x258] sm:$0xff]
    %v190 = vld [vmem:[#allocation5 + $0x260] sm:$0xff]
    %v191 = vld [vmem:[#allocation5 + $0x268] sm:$0xff]
    %v192 = vld [vmem:[#allocation5 + $0x270] sm:$0xff]
    %v193 = vld [vmem:[#allocation5 + $0x278] sm:$0xff]
    %v194 = vld [vmem:[#allocation5 + $0x280] sm:$0xff]
    %v195 = vld [vmem:[#allocation5 + $0x288] sm:$0xff]
    %v196 = vld [vmem:[#allocation5 + $0x290] sm:$0xff]
    %v197 = vld [vmem:[#allocation5 + $0x298] sm:$0xff]
    %v198 = vld [vmem:[#allocation5 + $0x2a0] sm:$0xff]
    %v199 = vld [vmem:[#allocation5 + $0x2a8] sm:$0xff]
    %v200 = vld [vmem:[#allocation5 + $0x2b0] sm:$0xff]
    %v201 = vld [vmem:[#allocation5 + $0x2b8] sm:$0xff]
    %v202 = vld [vmem:[#allocation5 + $0x2c0] sm:$0xff]
    %v203 = vld [vmem:[#allocation5 + $0x2c8] sm:$0xff]
    %v204 = vld [vmem:[#allocation5 + $0x2d0] sm:$0xff]
    %v205 = vld [vmem:[#allocation5 + $0x2d8] sm:$0xff]
    %v206 = vld [vmem:[#allocation5 + $0x2e0] sm:$0xff]
    %v207 = vld [vmem:[#allocation5 + $0x2e8] sm:$0xff]
    %v208 = vld [vmem:[#allocation5 + $0x2f0] sm:$0xff]
    %v209 = vld [vmem:[#allocation5 + $0x2f8] sm:$0xff]
    %v210 = vld [vmem:[#allocation5 + $0x300] sm:$0xff]
    %v211 = vld [vmem:[#allocation5 + $0x308] sm:$0xff]
    %v212 = vld [vmem:[#allocation5 + $0x310] sm:$0xff]
    %v213 = vld [vmem:[#allocation5 + $0x318] sm:$0xff]
    %v214 = vld [vmem:[#allocation5 + $0x320] sm:$0xff]
    %v215 = vld [vmem:[#allocation5 + $0x328] sm:$0xff]
    %v216 = vld [vmem:[#allocation5 + $0x330] sm:$0xff]
    %v217 = vld [vmem:[#allocation5 + $0x338] sm:$0xff]
    %v218 = vld [vmem:[#allocation5 + $0x340] sm:$0xff]
    %v219 = vld [vmem:[#allocation5 + $0x348] sm:$0xff]
    %v220 = vld [vmem:[#allocation5 + $0x350] sm:$0xff]
    %v221 = vld [vmem:[#allocation5 + $0x358] sm:$0xff]
    %v222 = vld [vmem:[#allocation5 + $0x360] sm:$0xff]
    %v223 = vld [vmem:[#allocation5 + $0x368] sm:$0xff]
    %v224 = vld [vmem:[#allocation5 + $0x370] sm:$0xff]
    %v225 = vld [vmem:[#allocation5 + $0x378] sm:$0xff]
    %v226 = vld [vmem:[#allocation5 + $0x380] sm:$0xff]
    %v227 = vld [vmem:[#allocation5 + $0x388] sm:$0xff]
    %v228 = vld [vmem:[#allocation5 + $0x390] sm:$0xff]
    %v229 = vld [vmem:[#allocation5 + $0x398] sm:$0xff]
    %v230 = vld [vmem:[#allocation5 + $0x3a0] sm:$0xff]
    %v231 = vld [vmem:[#allocation5 + $0x3a8] sm:$0xff]
    %v232 = vld [vmem:[#allocation5 + $0x3b0] sm:$0xff]
    %v233 = vld [vmem:[#allocation5 + $0x3b8] sm:$0xff]
    %v234 = vld [vmem:[#allocation5 + $0x3c0] sm:$0xff]
    %v235 = vld [vmem:[#allocation5 + $0x3c8] sm:$0xff]
    %v236 = vld [vmem:[#allocation5 + $0x3d0] sm:$0xff]
    %v237 = vld [vmem:[#allocation5 + $0x3d8] sm:$0xff]
    %v238 = vld [vmem:[#allocation5 + $0x3e0] sm:$0xff]
    %v239 = vld [vmem:[#allocation5 + $0x3e8] sm:$0xff]
    %v240 = vld [vmem:[#allocation5 + $0x3f0] sm:$0xff]
    %v241 = vld [vmem:[#allocation5 + $0x3f8] sm:$0xff]
    %v242 = vld [vmem:[#allocation5 + $0x400] sm:$0xff]
    %v243 = vld [vmem:[#allocation5 + $0x408] sm:$0xff]
    %v244 = vld [vmem:[#allocation5 + $0x410] sm:$0xff]
    %v245 = vld [vmem:[#allocation5 + $0x418] sm:$0xff]
    %v246 = vld [vmem:[#allocation5 + $0x420] sm:$0xff]
    %v247 = vld [vmem:[#allocation5 + $0x428] sm:$0xff]
    %v248 = vld [vmem:[#allocation5 + $0x430] sm:$0xff]
    %v249 = vld [vmem:[#allocation5 + $0x438] sm:$0xff]
    %v250 = vld [vmem:[#allocation5 + $0x440] sm:$0xff]
    %v251 = vld [vmem:[#allocation5 + $0x448] sm:$0xff]
    %v252 = vld [vmem:[#allocation5 + $0x450] sm:$0xff]
    %v253 = vld [vmem:[#allocation5 + $0x458] sm:$0xff]
    %v254 = vld [vmem:[#allocation5 + $0x460] sm:$0xff]
    %v255 = vld [vmem:[#allocation5 + $0x468] sm:$0xff]
    %v256 = vld [vmem:[#allocation5 + $0x470] sm:$0xff]
    %v257 = vld [vmem:[#allocation5 + $0x478] sm:$0xff]
    %v258 = vld [vmem:[#allocation5 + $0x480] sm:$0xff]
    %v259 = vld [vmem:[#allocation5 + $0x488] sm:$0xff]
    %v260 = vld [vmem:[#allocation5 + $0x490] sm:$0xff]
    %v261 = vld [vmem:[#allocation5 + $0x498] sm:$0xff]
    %v262 = vld [vmem:[#allocation5 + $0x4a0] sm:$0xff]
    %v263 = vld [vmem:[#allocation5 + $0x4a8] sm:$0xff]
    %v264 = vld [vmem:[#allocation5 + $0x4b0] sm:$0xff]
    %v265 = vld [vmem:[#allocation5 + $0x4b8] sm:$0xff]
    %v266 = vld [vmem:[#allocation5 + $0x4c0] sm:$0xff]
    %v267 = vld [vmem:[#allocation5 + $0x4c8] sm:$0xff]
    %v268 = vld [vmem:[#allocation5 + $0x4d0] sm:$0xff]
    %v269 = vld [vmem:[#allocation5 + $0x4d8] sm:$0xff]
    %v270 = vld [vmem:[#allocation5 + $0x4e0] sm:$0xff]
    %v271 = vld [vmem:[#allocation5 + $0x4e8] sm:$0xff]
    %v272 = vld [vmem:[#allocation5 + $0x4f0] sm:$0xff]
    %v273 = vld [vmem:[#allocation5 + $0x4f8] sm:$0xff]
    %v274 = vld [vmem:[#allocation5 + $0x500] sm:$0xff]
    %v275 = vld [vmem:[#allocation5 + $0x508] sm:$0xff]
    %v276 = vld [vmem:[#allocation5 + $0x510] sm:$0xff]
    %v277 = vld [vmem:[#allocation5 + $0x518] sm:$0xff]
    %v278 = vld [vmem:[#allocation5 + $0x520] sm:$0xff]
    %v279 = vld [vmem:[#allocation5 + $0x528] sm:$0xff]
    %v280 = vld [vmem:[#allocation5 + $0x530] sm:$0xff]
    %v281 = vld [vmem:[#allocation5 + $0x538] sm:$0xff]
    %v282 = vld [vmem:[#allocation5 + $0x540] sm:$0xff]
    %v283 = vld [vmem:[#allocation5 + $0x548] sm:$0xff]
    %v284 = vld [vmem:[#allocation5 + $0x550] sm:$0xff]
    %v285 = vld [vmem:[#allocation5 + $0x558] sm:$0xff]
    %v286 = vld [vmem:[#allocation5 + $0x560] sm:$0xff]
    %v287 = vld [vmem:[#allocation5 + $0x568] sm:$0xff]
    %v288 = vld [vmem:[#allocation5 + $0x570] sm:$0xff]
    %v289 = vld [vmem:[#allocation5 + $0x578] sm:$0xff]
    %v290 = vld [vmem:[#allocation5 + $0x580] sm:$0xff]
    %v291 = vld [vmem:[#allocation5 + $0x588] sm:$0xff]
    %v292 = vld [vmem:[#allocation5 + $0x590] sm:$0xff]
    %v293 = vld [vmem:[#allocation5 + $0x598] sm:$0xff]
    %v294 = vld [vmem:[#allocation5 + $0x5a0] sm:$0xff]
    %v295 = vld [vmem:[#allocation5 + $0x5a8] sm:$0xff]
    %v296 = vld [vmem:[#allocation5 + $0x5b0] sm:$0xff]
    %v297 = vld [vmem:[#allocation5 + $0x5b8] sm:$0xff]
    %v298 = vld [vmem:[#allocation5 + $0x5c0] sm:$0xff]
    %v299 = vld [vmem:[#allocation5 + $0x5c8] sm:$0xff]
    %v300 = vld [vmem:[#allocation5 + $0x5d0] sm:$0xff]
    %v301 = vld [vmem:[#allocation5 + $0x5d8] sm:$0xff]
    %v302 = vld [vmem:[#allocation5 + $0x5e0] sm:$0xff]
    %v303 = vld [vmem:[#allocation5 + $0x5e8] sm:$0xff]
    %v304 = vld [vmem:[#allocation5 + $0x5f0] sm:$0xff]
    %v305 = vld [vmem:[#allocation5 + $0x5f8] sm:$0xff]
    %v306 = vld [vmem:[#allocation7] sm:$0xf]
    %v308 = vlaneseq
    %v309 = vshrl.u32 %v308, 7
    %v310 = vsub.s32 0, %v309
    %v311 = vrot.slane %v306, %v310
    %v312 = vlaneseq
    %v313 = vshrl.u32 %v312, 7
    %v314 = vsub.s32 1, %v313
    %v315 = vrot.slane %v306, %v314
    %v316 = vlaneseq
    %v317 = vshrl.u32 %v316, 7
    %v318 = vsub.s32 2, %v317
    %v319 = vrot.slane %v306, %v318
    %v320 = vlaneseq
    %v321 = vshrl.u32 %v320, 7
    %v322 = vsub.s32 3, %v321
    %v323 = vrot.slane %v306, %v322
    %v520 = vunpack.c.l.b16 %v114
    %v521 = vunpack.c.h.b16 %v114
    %v522 = vunpack.c.l.b16 %v115
    %v523 = vunpack.c.h.b16 %v115
    %v524 = vunpack.c.l.b16 %v116
    %v525 = vunpack.c.h.b16 %v116
    %v526 = vunpack.c.l.b16 %v117
    %v527 = vunpack.c.h.b16 %v117
    %v528 = vunpack.c.l.b16 %v118
    %v529 = vunpack.c.h.b16 %v118
    %v530 = vunpack.c.l.b16 %v119
    %v531 = vunpack.c.h.b16 %v119
    %v532 = vunpack.c.l.b16 %v120
    %v533 = vunpack.c.h.b16 %v120
    %v534 = vunpack.c.l.b16 %v121
    %v535 = vunpack.c.h.b16 %v121
    %v536 = vunpack.c.l.b16 %v122
    %v537 = vunpack.c.h.b16 %v122
    %v538 = vunpack.c.l.b16 %v123
    %v539 = vunpack.c.h.b16 %v123
    %v540 = vunpack.c.l.b16 %v124
    %v541 = vunpack.c.h.b16 %v124
    %v542 = vunpack.c.l.b16 %v125
    %v543 = vunpack.c.h.b16 %v125
    %v544 = vunpack.c.l.b16 %v126
    %v545 = vunpack.c.h.b16 %v126
    %v546 = vunpack.c.l.b16 %v127
    %v547 = vunpack.c.h.b16 %v127
    %v548 = vunpack.c.l.b16 %v128
    %v549 = vunpack.c.h.b16 %v128
    %v550 = vunpack.c.l.b16 %v129
    %v551 = vunpack.c.h.b16 %v129
    %v552 = vunpack.c.l.b16 %v130
    %v553 = vunpack.c.h.b16 %v130
    %v554 = vunpack.c.l.b16 %v131
    %v555 = vunpack.c.h.b16 %v131
    %v556 = vunpack.c.l.b16 %v132
    %v557 = vunpack.c.h.b16 %v132
    %v558 = vunpack.c.l.b16 %v133
    %v559 = vunpack.c.h.b16 %v133
    %v560 = vunpack.c.l.b16 %v134
    %v561 = vunpack.c.h.b16 %v134
    %v562 = vunpack.c.l.b16 %v135
    %v563 = vunpack.c.h.b16 %v135
    %v564 = vunpack.c.l.b16 %v136
    %v565 = vunpack.c.h.b16 %v136
    %v566 = vunpack.c.l.b16 %v137
    %v567 = vunpack.c.h.b16 %v137
    %v568 = vunpack.c.l.b16 %v138
    %v569 = vunpack.c.h.b16 %v138
    %v570 = vunpack.c.l.b16 %v139
    %v571 = vunpack.c.h.b16 %v139
    %v572 = vunpack.c.l.b16 %v140
    %v573 = vunpack.c.h.b16 %v140
    %v574 = vunpack.c.l.b16 %v141
    %v575 = vunpack.c.h.b16 %v141
    %v576 = vunpack.c.l.b16 %v142
    %v577 = vunpack.c.h.b16 %v142
    %v578 = vunpack.c.l.b16 %v143
    %v579 = vunpack.c.h.b16 %v143
    %v580 = vunpack.c.l.b16 %v144
    %v581 = vunpack.c.h.b16 %v144
    %v582 = vunpack.c.l.b16 %v145
    %v583 = vunpack.c.h.b16 %v145
    %v584 = vunpack.c.l.b16 %v146
    %v585 = vunpack.c.h.b16 %v146
    %v586 = vunpack.c.l.b16 %v147
    %v587 = vunpack.c.h.b16 %v147
    %v588 = vunpack.c.l.b16 %v148
    %v589 = vunpack.c.h.b16 %v148
    %v590 = vunpack.c.l.b16 %v149
    %v591 = vunpack.c.h.b16 %v149
    %v592 = vunpack.c.l.b16 %v150
    %v593 = vunpack.c.h.b16 %v150
    %v594 = vunpack.c.l.b16 %v151
    %v595 = vunpack.c.h.b16 %v151
    %v596 = vunpack.c.l.b16 %v152
    %v597 = vunpack.c.h.b16 %v152
    %v598 = vunpack.c.l.b16 %v153
    %v599 = vunpack.c.h.b16 %v153
    %v600 = vunpack.c.l.b16 %v154
    %v601 = vunpack.c.h.b16 %v154
    %v602 = vunpack.c.l.b16 %v155
    %v603 = vunpack.c.h.b16 %v155
    %v604 = vunpack.c.l.b16 %v156
    %v605 = vunpack.c.h.b16 %v156
    %v606 = vunpack.c.l.b16 %v157
    %v607 = vunpack.c.h.b16 %v157
    %v608 = vunpack.c.l.b16 %v158
    %v609 = vunpack.c.h.b16 %v158
    %v610 = vunpack.c.l.b16 %v159
    %v611 = vunpack.c.h.b16 %v159
    %v612 = vunpack.c.l.b16 %v160
    %v613 = vunpack.c.h.b16 %v160
    %v614 = vunpack.c.l.b16 %v161
    %v615 = vunpack.c.h.b16 %v161
    %v616 = vunpack.c.l.b16 %v162
    %v617 = vunpack.c.h.b16 %v162
    %v618 = vunpack.c.l.b16 %v163
    %v619 = vunpack.c.h.b16 %v163
    %v620 = vunpack.c.l.b16 %v164
    %v621 = vunpack.c.h.b16 %v164
    %v622 = vunpack.c.l.b16 %v165
    %v623 = vunpack.c.h.b16 %v165
    %v624 = vunpack.c.l.b16 %v166
    %v625 = vunpack.c.h.b16 %v166
    %v626 = vunpack.c.l.b16 %v167
    %v627 = vunpack.c.h.b16 %v167
    %v628 = vunpack.c.l.b16 %v168
    %v629 = vunpack.c.h.b16 %v168
    %v630 = vunpack.c.l.b16 %v169
    %v631 = vunpack.c.h.b16 %v169
    %v632 = vunpack.c.l.b16 %v170
    %v633 = vunpack.c.h.b16 %v170
    %v634 = vunpack.c.l.b16 %v171
    %v635 = vunpack.c.h.b16 %v171
    %v636 = vunpack.c.l.b16 %v172
    %v637 = vunpack.c.h.b16 %v172
    %v638 = vunpack.c.l.b16 %v173
    %v639 = vunpack.c.h.b16 %v173
    %v640 = vunpack.c.l.b16 %v174
    %v641 = vunpack.c.h.b16 %v174
    %v642 = vunpack.c.l.b16 %v175
    %v643 = vunpack.c.h.b16 %v175
    %v644 = vunpack.c.l.b16 %v176
    %v645 = vunpack.c.h.b16 %v176
    %v646 = vunpack.c.l.b16 %v177
    %v647 = vunpack.c.h.b16 %v177
    %v648 = vunpack.c.l.b16 %v178
    %v649 = vunpack.c.h.b16 %v178
    %v650 = vunpack.c.l.b16 %v179
    %v651 = vunpack.c.h.b16 %v179
    %v652 = vunpack.c.l.b16 %v180
    %v653 = vunpack.c.h.b16 %v180
    %v654 = vunpack.c.l.b16 %v181
    %v655 = vunpack.c.h.b16 %v181
    %v656 = vunpack.c.l.b16 %v182
    %v657 = vunpack.c.h.b16 %v182
    %v658 = vunpack.c.l.b16 %v183
    %v659 = vunpack.c.h.b16 %v183
    %v660 = vunpack.c.l.b16 %v184
    %v661 = vunpack.c.h.b16 %v184
    %v662 = vunpack.c.l.b16 %v185
    %v663 = vunpack.c.h.b16 %v185
    %v664 = vunpack.c.l.b16 %v186
    %v665 = vunpack.c.h.b16 %v186
    %v666 = vunpack.c.l.b16 %v187
    %v667 = vunpack.c.h.b16 %v187
    %v668 = vunpack.c.l.b16 %v188
    %v669 = vunpack.c.h.b16 %v188
    %v670 = vunpack.c.l.b16 %v189
    %v671 = vunpack.c.h.b16 %v189
    %v672 = vunpack.c.l.b16 %v190
    %v673 = vunpack.c.h.b16 %v190
    %v674 = vunpack.c.l.b16 %v191
    %v675 = vunpack.c.h.b16 %v191
    %v676 = vunpack.c.l.b16 %v192
    %v677 = vunpack.c.h.b16 %v192
    %v678 = vunpack.c.l.b16 %v193
    %v679 = vunpack.c.h.b16 %v193
    %v680 = vunpack.c.l.b16 %v194
    %v681 = vunpack.c.h.b16 %v194
    %v682 = vunpack.c.l.b16 %v195
    %v683 = vunpack.c.h.b16 %v195
    %v684 = vunpack.c.l.b16 %v196
    %v685 = vunpack.c.h.b16 %v196
    %v686 = vunpack.c.l.b16 %v197
    %v687 = vunpack.c.h.b16 %v197
    %v688 = vunpack.c.l.b16 %v198
    %v689 = vunpack.c.h.b16 %v198
    %v690 = vunpack.c.l.b16 %v199
    %v691 = vunpack.c.h.b16 %v199
    %v692 = vunpack.c.l.b16 %v200
    %v693 = vunpack.c.h.b16 %v200
    %v694 = vunpack.c.l.b16 %v201
    %v695 = vunpack.c.h.b16 %v201
    %v696 = vunpack.c.l.b16 %v202
    %v697 = vunpack.c.h.b16 %v202
    %v698 = vunpack.c.l.b16 %v203
    %v699 = vunpack.c.h.b16 %v203
    %v700 = vunpack.c.l.b16 %v204
    %v701 = vunpack.c.h.b16 %v204
    %v702 = vunpack.c.l.b16 %v205
    %v703 = vunpack.c.h.b16 %v205
    %v704 = vunpack.c.l.b16 %v206
    %v705 = vunpack.c.h.b16 %v206
    %v706 = vunpack.c.l.b16 %v207
    %v707 = vunpack.c.h.b16 %v207
    %v708 = vunpack.c.l.b16 %v208
    %v709 = vunpack.c.h.b16 %v208
    %v710 = vunpack.c.l.b16 %v209
    %v711 = vunpack.c.h.b16 %v209
    %v712 = vunpack.c.l.b16 %v210
    %v713 = vunpack.c.h.b16 %v210
    %v714 = vunpack.c.l.b16 %v211
    %v715 = vunpack.c.h.b16 %v211
    %v716 = vunpack.c.l.b16 %v212
    %v717 = vunpack.c.h.b16 %v212
    %v718 = vunpack.c.l.b16 %v213
    %v719 = vunpack.c.h.b16 %v213
    %v720 = vunpack.c.l.b16 %v214
    %v721 = vunpack.c.h.b16 %v214
    %v722 = vunpack.c.l.b16 %v215
    %v723 = vunpack.c.h.b16 %v215
    %v724 = vunpack.c.l.b16 %v216
    %v725 = vunpack.c.h.b16 %v216
    %v726 = vunpack.c.l.b16 %v217
    %v727 = vunpack.c.h.b16 %v217
    %v728 = vunpack.c.l.b16 %v218
    %v729 = vunpack.c.h.b16 %v218
    %v730 = vunpack.c.l.b16 %v219
    %v731 = vunpack.c.h.b16 %v219
    %v732 = vunpack.c.l.b16 %v220
    %v733 = vunpack.c.h.b16 %v220
    %v734 = vunpack.c.l.b16 %v221
    %v735 = vunpack.c.h.b16 %v221
    %v736 = vunpack.c.l.b16 %v222
    %v737 = vunpack.c.h.b16 %v222
    %v738 = vunpack.c.l.b16 %v223
    %v739 = vunpack.c.h.b16 %v223
    %v740 = vunpack.c.l.b16 %v224
    %v741 = vunpack.c.h.b16 %v224
    %v742 = vunpack.c.l.b16 %v225
    %v743 = vunpack.c.h.b16 %v225
    %v744 = vunpack.c.l.b16 %v226
    %v745 = vunpack.c.h.b16 %v226
    %v746 = vunpack.c.l.b16 %v227
    %v747 = vunpack.c.h.b16 %v227
    %v748 = vunpack.c.l.b16 %v228
    %v749 = vunpack.c.h.b16 %v228
    %v750 = vunpack.c.l.b16 %v229
    %v751 = vunpack.c.h.b16 %v229
    %v752 = vunpack.c.l.b16 %v230
    %v753 = vunpack.c.h.b16 %v230
    %v754 = vunpack.c.l.b16 %v231
    %v755 = vunpack.c.h.b16 %v231
    %v756 = vunpack.c.l.b16 %v232
    %v757 = vunpack.c.h.b16 %v232
    %v758 = vunpack.c.l.b16 %v233
    %v759 = vunpack.c.h.b16 %v233
    %v760 = vunpack.c.l.b16 %v234
    %v761 = vunpack.c.h.b16 %v234
    %v762 = vunpack.c.l.b16 %v235
    %v763 = vunpack.c.h.b16 %v235
    %v764 = vunpack.c.l.b16 %v236
    %v765 = vunpack.c.h.b16 %v236
    %v766 = vunpack.c.l.b16 %v237
    %v767 = vunpack.c.h.b16 %v237
    %v768 = vunpack.c.l.b16 %v238
    %v769 = vunpack.c.h.b16 %v238
    %v770 = vunpack.c.l.b16 %v239
    %v771 = vunpack.c.h.b16 %v239
    %v772 = vunpack.c.l.b16 %v240
    %v773 = vunpack.c.h.b16 %v240
    %v774 = vunpack.c.l.b16 %v241
    %v775 = vunpack.c.h.b16 %v241
    %v776 = vunpack.c.l.b16 %v242
    %v777 = vunpack.c.h.b16 %v242
    %v778 = vunpack.c.l.b16 %v243
    %v779 = vunpack.c.h.b16 %v243
    %v780 = vunpack.c.l.b16 %v244
    %v781 = vunpack.c.h.b16 %v244
    %v782 = vunpack.c.l.b16 %v245
    %v783 = vunpack.c.h.b16 %v245
    %v784 = vunpack.c.l.b16 %v246
    %v785 = vunpack.c.h.b16 %v246
    %v786 = vunpack.c.l.b16 %v247
    %v787 = vunpack.c.h.b16 %v247
    %v788 = vunpack.c.l.b16 %v248
    %v789 = vunpack.c.h.b16 %v248
    %v790 = vunpack.c.l.b16 %v249
    %v791 = vunpack.c.h.b16 %v249
    %v792 = vunpack.c.l.b16 %v250
    %v793 = vunpack.c.h.b16 %v250
    %v794 = vunpack.c.l.b16 %v251
    %v795 = vunpack.c.h.b16 %v251
    %v796 = vunpack.c.l.b16 %v252
    %v797 = vunpack.c.h.b16 %v252
    %v798 = vunpack.c.l.b16 %v253
    %v799 = vunpack.c.h.b16 %v253
    %v800 = vunpack.c.l.b16 %v254
    %v801 = vunpack.c.h.b16 %v254
    %v802 = vunpack.c.l.b16 %v255
    %v803 = vunpack.c.h.b16 %v255
    %v804 = vunpack.c.l.b16 %v256
    %v805 = vunpack.c.h.b16 %v256
    %v806 = vunpack.c.l.b16 %v257
    %v807 = vunpack.c.h.b16 %v257
    %v808 = vunpack.c.l.b16 %v258
    %v809 = vunpack.c.h.b16 %v258
    %v810 = vunpack.c.l.b16 %v259
    %v811 = vunpack.c.h.b16 %v259
    %v812 = vunpack.c.l.b16 %v260
    %v813 = vunpack.c.h.b16 %v260
    %v814 = vunpack.c.l.b16 %v261
    %v815 = vunpack.c.h.b16 %v261
    %v816 = vunpack.c.l.b16 %v262
    %v817 = vunpack.c.h.b16 %v262
    %v818 = vunpack.c.l.b16 %v263
    %v819 = vunpack.c.h.b16 %v263
    %v820 = vunpack.c.l.b16 %v264
    %v821 = vunpack.c.h.b16 %v264
    %v822 = vunpack.c.l.b16 %v265
    %v823 = vunpack.c.h.b16 %v265
    %v824 = vunpack.c.l.b16 %v266
    %v825 = vunpack.c.h.b16 %v266
    %v826 = vunpack.c.l.b16 %v267
    %v827 = vunpack.c.h.b16 %v267
    %v828 = vunpack.c.l.b16 %v268
    %v829 = vunpack.c.h.b16 %v268
    %v830 = vunpack.c.l.b16 %v269
    %v831 = vunpack.c.h.b16 %v269
    %v832 = vunpack.c.l.b16 %v270
    %v833 = vunpack.c.h.b16 %v270
    %v834 = vunpack.c.l.b16 %v271
    %v835 = vunpack.c.h.b16 %v271
    %v836 = vunpack.c.l.b16 %v272
    %v837 = vunpack.c.h.b16 %v272
    %v838 = vunpack.c.l.b16 %v273
    %v839 = vunpack.c.h.b16 %v273
    %v840 = vunpack.c.l.b16 %v274
    %v841 = vunpack.c.h.b16 %v274
    %v842 = vunpack.c.l.b16 %v275
    %v843 = vunpack.c.h.b16 %v275
    %v844 = vunpack.c.l.b16 %v276
    %v845 = vunpack.c.h.b16 %v276
    %v846 = vunpack.c.l.b16 %v277
    %v847 = vunpack.c.h.b16 %v277
    %v848 = vunpack.c.l.b16 %v278
    %v849 = vunpack.c.h.b16 %v278
    %v850 = vunpack.c.l.b16 %v279
    %v851 = vunpack.c.h.b16 %v279
    %v852 = vunpack.c.l.b16 %v280
    %v853 = vunpack.c.h.b16 %v280
    %v854 = vunpack.c.l.b16 %v281
    %v855 = vunpack.c.h.b16 %v281
    %v856 = vunpack.c.l.b16 %v282
    %v857 = vunpack.c.h.b16 %v282
    %v858 = vunpack.c.l.b16 %v283
    %v859 = vunpack.c.h.b16 %v283
    %v860 = vunpack.c.l.b16 %v284
    %v861 = vunpack.c.h.b16 %v284
    %v862 = vunpack.c.l.b16 %v285
    %v863 = vunpack.c.h.b16 %v285
    %v864 = vunpack.c.l.b16 %v286
    %v865 = vunpack.c.h.b16 %v286
    %v866 = vunpack.c.l.b16 %v287
    %v867 = vunpack.c.h.b16 %v287
    %v868 = vunpack.c.l.b16 %v288
    %v869 = vunpack.c.h.b16 %v288
    %v870 = vunpack.c.l.b16 %v289
    %v871 = vunpack.c.h.b16 %v289
    %v872 = vunpack.c.l.b16 %v290
    %v873 = vunpack.c.h.b16 %v290
    %v874 = vunpack.c.l.b16 %v291
    %v875 = vunpack.c.h.b16 %v291
    %v876 = vunpack.c.l.b16 %v292
    %v877 = vunpack.c.h.b16 %v292
    %v878 = vunpack.c.l.b16 %v293
    %v879 = vunpack.c.h.b16 %v293
    %v880 = vunpack.c.l.b16 %v294
    %v881 = vunpack.c.h.b16 %v294
    %v882 = vunpack.c.l.b16 %v295
    %v883 = vunpack.c.h.b16 %v295
    %v884 = vunpack.c.l.b16 %v296
    %v885 = vunpack.c.h.b16 %v296
    %v886 = vunpack.c.l.b16 %v297
    %v887 = vunpack.c.h.b16 %v297
    %v888 = vunpack.c.l.b16 %v298
    %v889 = vunpack.c.h.b16 %v298
    %v890 = vunpack.c.l.b16 %v299
    %v891 = vunpack.c.h.b16 %v299
    %v892 = vunpack.c.l.b16 %v300
    %v893 = vunpack.c.h.b16 %v300
    %v894 = vunpack.c.l.b16 %v301
    %v895 = vunpack.c.h.b16 %v301
    %v896 = vunpack.c.l.b16 %v302
    %v897 = vunpack.c.h.b16 %v302
    %v898 = vunpack.c.l.b16 %v303
    %v899 = vunpack.c.h.b16 %v303
    %v900 = vunpack.c.l.b16 %v304
    %v901 = vunpack.c.h.b16 %v304
    %v902 = vunpack.c.l.b16 %v305
    %v903 = vunpack.c.h.b16 %v305
    %v904 = vpack.c.b16 %v524, %v520
    %v905 = vpack.c.b16 %v525, %v521
    %v906 = vpack.c.b16 %v526, %v522
    %v907 = vpack.c.b16 %v527, %v523
    %v908 = vpack.c.b16 %v532, %v528
    %v909 = vpack.c.b16 %v533, %v529
    %v910 = vpack.c.b16 %v534, %v530
    %v911 = vpack.c.b16 %v535, %v531
    %v912 = vpack.c.b16 %v540, %v536
    %v913 = vpack.c.b16 %v541, %v537
    %v914 = vpack.c.b16 %v542, %v538
    %v915 = vpack.c.b16 %v543, %v539
    %v916 = vpack.c.b16 %v548, %v544
    %v917 = vpack.c.b16 %v549, %v545
    %v918 = vpack.c.b16 %v550, %v546
    %v919 = vpack.c.b16 %v551, %v547
    %v920 = vpack.c.b16 %v556, %v552
    %v921 = vpack.c.b16 %v557, %v553
    %v922 = vpack.c.b16 %v558, %v554
    %v923 = vpack.c.b16 %v559, %v555
    %v924 = vpack.c.b16 %v564, %v560
    %v925 = vpack.c.b16 %v565, %v561
    %v926 = vpack.c.b16 %v566, %v562
    %v927 = vpack.c.b16 %v567, %v563
    %v928 = vpack.c.b16 %v572, %v568
    %v929 = vpack.c.b16 %v573, %v569
    %v930 = vpack.c.b16 %v574, %v570
    %v931 = vpack.c.b16 %v575, %v571
    %v932 = vpack.c.b16 %v580, %v576
    %v933 = vpack.c.b16 %v581, %v577
    %v934 = vpack.c.b16 %v582, %v578
    %v935 = vpack.c.b16 %v583, %v579
    %v936 = vpack.c.b16 %v588, %v584
    %v937 = vpack.c.b16 %v589, %v585
    %v938 = vpack.c.b16 %v590, %v586
    %v939 = vpack.c.b16 %v591, %v587
    %v940 = vpack.c.b16 %v596, %v592
    %v941 = vpack.c.b16 %v597, %v593
    %v942 = vpack.c.b16 %v598, %v594
    %v943 = vpack.c.b16 %v599, %v595
    %v944 = vpack.c.b16 %v604, %v600
    %v945 = vpack.c.b16 %v605, %v601
    %v946 = vpack.c.b16 %v606, %v602
    %v947 = vpack.c.b16 %v607, %v603
    %v948 = vpack.c.b16 %v612, %v608
    %v949 = vpack.c.b16 %v613, %v609
    %v950 = vpack.c.b16 %v614, %v610
    %v951 = vpack.c.b16 %v615, %v611
    %v952 = vpack.c.b16 %v620, %v616
    %v953 = vpack.c.b16 %v621, %v617
    %v954 = vpack.c.b16 %v622, %v618
    %v955 = vpack.c.b16 %v623, %v619
    %v956 = vpack.c.b16 %v628, %v624
    %v957 = vpack.c.b16 %v629, %v625
    %v958 = vpack.c.b16 %v630, %v626
    %v959 = vpack.c.b16 %v631, %v627
    %v960 = vpack.c.b16 %v636, %v632
    %v961 = vpack.c.b16 %v637, %v633
    %v962 = vpack.c.b16 %v638, %v634
    %v963 = vpack.c.b16 %v639, %v635
    %v964 = vpack.c.b16 %v644, %v640
    %v965 = vpack.c.b16 %v645, %v641
    %v966 = vpack.c.b16 %v646, %v642
    %v967 = vpack.c.b16 %v647, %v643
    %v968 = vpack.c.b16 %v652, %v648
    %v969 = vpack.c.b16 %v653, %v649
    %v970 = vpack.c.b16 %v654, %v650
    %v971 = vpack.c.b16 %v655, %v651
    %v972 = vpack.c.b16 %v660, %v656
    %v973 = vpack.c.b16 %v661, %v657
    %v974 = vpack.c.b16 %v662, %v658
    %v975 = vpack.c.b16 %v663, %v659
    %v976 = vpack.c.b16 %v668, %v664
    %v977 = vpack.c.b16 %v669, %v665
    %v978 = vpack.c.b16 %v670, %v666
    %v979 = vpack.c.b16 %v671, %v667
    %v980 = vpack.c.b16 %v676, %v672
    %v981 = vpack.c.b16 %v677, %v673
    %v982 = vpack.c.b16 %v678, %v674
    %v983 = vpack.c.b16 %v679, %v675
    %v984 = vpack.c.b16 %v684, %v680
    %v985 = vpack.c.b16 %v685, %v681
    %v986 = vpack.c.b16 %v686, %v682
    %v987 = vpack.c.b16 %v687, %v683
    %v988 = vpack.c.b16 %v692, %v688
    %v989 = vpack.c.b16 %v693, %v689
    %v990 = vpack.c.b16 %v694, %v690
    %v991 = vpack.c.b16 %v695, %v691
    %v992 = vpack.c.b16 %v700, %v696
    %v993 = vpack.c.b16 %v701, %v697
    %v994 = vpack.c.b16 %v702, %v698
    %v995 = vpack.c.b16 %v703, %v699
    %v996 = vpack.c.b16 %v708, %v704
    %v997 = vpack.c.b16 %v709, %v705
    %v998 = vpack.c.b16 %v710, %v706
    %v999 = vpack.c.b16 %v711, %v707
    %v1000 = vpack.c.b16 %v716, %v712
    %v1001 = vpack.c.b16 %v717, %v713
    %v1002 = vpack.c.b16 %v718, %v714
    %v1003 = vpack.c.b16 %v719, %v715
    %v1004 = vpack.c.b16 %v724, %v720
    %v1005 = vpack.c.b16 %v725, %v721
    %v1006 = vpack.c.b16 %v726, %v722
    %v1007 = vpack.c.b16 %v727, %v723
    %v1008 = vpack.c.b16 %v732, %v728
    %v1009 = vpack.c.b16 %v733, %v729
    %v1010 = vpack.c.b16 %v734, %v730
    %v1011 = vpack.c.b16 %v735, %v731
    %v1012 = vpack.c.b16 %v740, %v736
    %v1013 = vpack.c.b16 %v741, %v737
    %v1014 = vpack.c.b16 %v742, %v738
    %v1015 = vpack.c.b16 %v743, %v739
    %v1016 = vpack.c.b16 %v748, %v744
    %v1017 = vpack.c.b16 %v749, %v745
    %v1018 = vpack.c.b16 %v750, %v746
    %v1019 = vpack.c.b16 %v751, %v747
    %v1020 = vpack.c.b16 %v756, %v752
    %v1021 = vpack.c.b16 %v757, %v753
    %v1022 = vpack.c.b16 %v758, %v754
    %v1023 = vpack.c.b16 %v759, %v755
    %v1024 = vpack.c.b16 %v764, %v760
    %v1025 = vpack.c.b16 %v765, %v761
    %v1026 = vpack.c.b16 %v766, %v762
    %v1027 = vpack.c.b16 %v767, %v763
    %v1028 = vpack.c.b16 %v772, %v768
    %v1029 = vpack.c.b16 %v773, %v769
    %v1030 = vpack.c.b16 %v774, %v770
    %v1031 = vpack.c.b16 %v775, %v771
    %v1032 = vpack.c.b16 %v780, %v776
    %v1033 = vpack.c.b16 %v781, %v777
    %v1034 = vpack.c.b16 %v782, %v778
    %v1035 = vpack.c.b16 %v783, %v779
    %v1036 = vpack.c.b16 %v788, %v784
    %v1037 = vpack.c.b16 %v789, %v785
    %v1038 = vpack.c.b16 %v790, %v786
    %v1039 = vpack.c.b16 %v791, %v787
    %v1040 = vpack.c.b16 %v796, %v792
    %v1041 = vpack.c.b16 %v797, %v793
    %v1042 = vpack.c.b16 %v798, %v794
    %v1043 = vpack.c.b16 %v799, %v795
    %v1044 = vpack.c.b16 %v804, %v800
    %v1045 = vpack.c.b16 %v805, %v801
    %v1046 = vpack.c.b16 %v806, %v802
    %v1047 = vpack.c.b16 %v807, %v803
    %v1048 = vpack.c.b16 %v812, %v808
    %v1049 = vpack.c.b16 %v813, %v809
    %v1050 = vpack.c.b16 %v814, %v810
    %v1051 = vpack.c.b16 %v815, %v811
    %v1052 = vpack.c.b16 %v820, %v816
    %v1053 = vpack.c.b16 %v821, %v817
    %v1054 = vpack.c.b16 %v822, %v818
    %v1055 = vpack.c.b16 %v823, %v819
    %v1056 = vpack.c.b16 %v828, %v824
    %v1057 = vpack.c.b16 %v829, %v825
    %v1058 = vpack.c.b16 %v830, %v826
    %v1059 = vpack.c.b16 %v831, %v827
    %v1060 = vpack.c.b16 %v836, %v832
    %v1061 = vpack.c.b16 %v837, %v833
    %v1062 = vpack.c.b16 %v838, %v834
    %v1063 = vpack.c.b16 %v839, %v835
    %v1064 = vpack.c.b16 %v844, %v840
    %v1065 = vpack.c.b16 %v845, %v841
    %v1066 = vpack.c.b16 %v846, %v842
    %v1067 = vpack.c.b16 %v847, %v843
    %v1068 = vpack.c.b16 %v852, %v848
    %v1069 = vpack.c.b16 %v853, %v849
    %v1070 = vpack.c.b16 %v854, %v850
    %v1071 = vpack.c.b16 %v855, %v851
    %v1072 = vpack.c.b16 %v860, %v856
    %v1073 = vpack.c.b16 %v861, %v857
    %v1074 = vpack.c.b16 %v862, %v858
    %v1075 = vpack.c.b16 %v863, %v859
    %v1076 = vpack.c.b16 %v868, %v864
    %v1077 = vpack.c.b16 %v869, %v865
    %v1078 = vpack.c.b16 %v870, %v866
    %v1079 = vpack.c.b16 %v871, %v867
    %v1080 = vpack.c.b16 %v876, %v872
    %v1081 = vpack.c.b16 %v877, %v873
    %v1082 = vpack.c.b16 %v878, %v874
    %v1083 = vpack.c.b16 %v879, %v875
    %v1084 = vpack.c.b16 %v884, %v880
    %v1085 = vpack.c.b16 %v885, %v881
    %v1086 = vpack.c.b16 %v886, %v882
    %v1087 = vpack.c.b16 %v887, %v883
    %v1088 = vpack.c.b16 %v892, %v888
    %v1089 = vpack.c.b16 %v893, %v889
    %v1090 = vpack.c.b16 %v894, %v890
    %v1091 = vpack.c.b16 %v895, %v891
    %v1092 = vpack.c.b16 %v900, %v896
    %v1093 = vpack.c.b16 %v901, %v897
    %v1094 = vpack.c.b16 %v902, %v898
    %v1095 = vpack.c.b16 %v903, %v899
    %1288 = vmatprep.subr.bf16.mxu0 %v933
    %1289 = vmatpush1.bf16.msra.mxu0 %v932
    %1290 = vmatprep.subr.bf16.mxu0 %v929
    %1291 = vmatpush1.bf16.msra.mxu0 %v928
    %1292 = vmatprep.subr.bf16.mxu0 %v925
    %1293 = vmatpush1.bf16.msra.mxu0 %v924
    %1294 = vmatprep.subr.bf16.mxu0 %v921
    %1295 = vmatpush1.bf16.msra.mxu0 %v920
    %1296 = vmatprep.subr.bf16.mxu0 %v917
    %1297 = vmatpush1.bf16.msra.mxu0 %v916
    %1298 = vmatprep.subr.bf16.mxu0 %v913
    %1299 = vmatpush1.bf16.msra.mxu0 %v912
    %1300 = vmatprep.subr.bf16.mxu0 %v909
    %1301 = vmatpush1.bf16.msra.mxu0 %v908
    %1302 = vmatprep.subr.bf16.mxu0 %v905
    %1303 = vmatpush1.bf16.msra.mxu0 %v904
    %1304 = vmatprep.subr.bf16.mxu0 %v965
    %1305 = vmatpush2.bf16.msra.mxu0 %v964
    %1306 = vmatprep.subr.bf16.mxu0 %v961
    %1307 = vmatpush2.bf16.msra.mxu0 %v960
    %1308 = vmatprep.subr.bf16.mxu0 %v957
    %1309 = vmatpush2.bf16.msra.mxu0 %v956
    %1310 = vmatprep.subr.bf16.mxu0 %v953
    %1311 = vmatpush2.bf16.msra.mxu0 %v952
    %1312 = vmatprep.subr.bf16.mxu0 %v949
    %1313 = vmatpush2.bf16.msra.mxu0 %v948
    %1314 = vmatprep.subr.bf16.mxu0 %v945
    %1315 = vmatpush2.bf16.msra.mxu0 %v944
    %1316 = vmatprep.subr.bf16.mxu0 %v941
    %1317 = vmatpush2.bf16.msra.mxu0 %v940
    %1318 = vmatprep.subr.bf16.mxu0 %v937
    %1319 = vmatpush2.bf16.msra.mxu0 %v936
    %1320 = vmatprep.mubr.bf16.mxu0 %v109
    %1321 = vmatmul.mubr.bf16.gmra.mxu0 %v108
    %v1322 = vpop.f32.mrf.mxu0
    %v1323 = vadd.f32 %v311, %v1322
    %v1324 = vpop.f32.mrf.mxu0
    %v1325 = vadd.f32 %v315, %v1324
    %v1326 = vpop.f32.mrf.mxu0
    %v1327 = vpop.f32.mrf.mxu0
    %1328 = vdwg.mxu0
    %1329 = vmatprep.subr.bf16.mxu0 %v997
    %1330 = vmatpush1.bf16.msra.mxu0 %v996
    %1331 = vmatprep.subr.bf16.mxu0 %v993
    %1332 = vmatpush1.bf16.msra.mxu0 %v992
    %1333 = vmatprep.subr.bf16.mxu0 %v989
    %1334 = vmatpush1.bf16.msra.mxu0 %v988
    %1335 = vmatprep.subr.bf16.mxu0 %v985
    %1336 = vmatpush1.bf16.msra.mxu0 %v984
    %1337 = vmatprep.subr.bf16.mxu0 %v981
    %1338 = vmatpush1.bf16.msra.mxu0 %v980
    %1339 = vmatprep.subr.bf16.mxu0 %v977
    %1340 = vmatpush1.bf16.msra.mxu0 %v976
    %1341 = vmatprep.subr.bf16.mxu0 %v973
    %1342 = vmatpush1.bf16.msra.mxu0 %v972
    %1343 = vmatprep.subr.bf16.mxu0 %v969
    %1344 = vmatpush1.bf16.msra.mxu0 %v968
    %1345 = vmatprep.subr.bf16.mxu0 %v1029
    %1346 = vmatpush2.bf16.msra.mxu0 %v1028
    %1347 = vmatprep.subr.bf16.mxu0 %v1025
    %1348 = vmatpush2.bf16.msra.mxu0 %v1024
    %1349 = vmatprep.subr.bf16.mxu0 %v1021
    %1350 = vmatpush2.bf16.msra.mxu0 %v1020
    %1351 = vmatprep.subr.bf16.mxu0 %v1017
    %1352 = vmatpush2.bf16.msra.mxu0 %v1016
    %1353 = vmatprep.subr.bf16.mxu0 %v1013
    %1354 = vmatpush2.bf16.msra.mxu0 %v1012
    %1355 = vmatprep.subr.bf16.mxu0 %v1009
    %1356 = vmatpush2.bf16.msra.mxu0 %v1008
    %1357 = vmatprep.subr.bf16.mxu0 %v1005
    %1358 = vmatpush2.bf16.msra.mxu0 %v1004
    %1359 = vmatprep.subr.bf16.mxu0 %v1001
    %1360 = vmatpush2.bf16.msra.mxu0 %v1000
    %1361 = vmatprep.mubr.bf16.mxu0 %v111
    %1362 = vmatmul.mubr.bf16.gmra.mxu0 %v110
    %v1363 = vpop.f32.mrf.mxu0
    %v1364 = vadd.f32 %v1323, %v1363
    %v1365 = vpop.f32.mrf.mxu0
    %v1366 = vadd.f32 %v1325, %v1365
    %v1367 = vpop.f32.mrf.mxu0
    %v1368 = vpop.f32.mrf.mxu0
    %1369 = vdwg.mxu0
    %1370 = vmatprep.subr.bf16.mxu0 %v1061
    %1371 = vmatpush1.bf16.msra.mxu0 %v1060
    %1372 = vmatprep.subr.bf16.mxu0 %v1057
    %1373 = vmatpush1.bf16.msra.mxu0 %v1056
    %1374 = vmatprep.subr.bf16.mxu0 %v1053
    %1375 = vmatpush1.bf16.msra.mxu0 %v1052
    %1376 = vmatprep.subr.bf16.mxu0 %v1049
    %1377 = vmatpush1.bf16.msra.mxu0 %v1048
    %1378 = vmatprep.subr.bf16.mxu0 %v1045
    %1379 = vmatpush1.bf16.msra.mxu0 %v1044
    %1380 = vmatprep.subr.bf16.mxu0 %v1041
    %1381 = vmatpush1.bf16.msra.mxu0 %v1040
    %1382 = vmatprep.subr.bf16.mxu0 %v1037
    %1383 = vmatpush1.bf16.msra.mxu0 %v1036
    %1384 = vmatprep.subr.bf16.mxu0 %v1033
    %1385 = vmatpush1.bf16.msra.mxu0 %v1032
    %1386 = vmatprep.subr.bf16.mxu0 %v1093
    %1387 = vmatpush2.bf16.msra.mxu0 %v1092
    %1388 = vmatprep.subr.bf16.mxu0 %v1089
    %1389 = vmatpush2.bf16.msra.mxu0 %v1088
    %1390 = vmatprep.subr.bf16.mxu0 %v1085
    %1391 = vmatpush2.bf16.msra.mxu0 %v1084
    %1392 = vmatprep.subr.bf16.mxu0 %v1081
    %1393 = vmatpush2.bf16.msra.mxu0 %v1080
    %1394 = vmatprep.subr.bf16.mxu0 %v1077
    %1395 = vmatpush2.bf16.msra.mxu0 %v1076
    %1396 = vmatprep.subr.bf16.mxu0 %v1073
    %1397 = vmatpush2.bf16.msra.mxu0 %v1072
    %1398 = vmatprep.subr.bf16.mxu0 %v1069
    %1399 = vmatpush2.bf16.msra.mxu0 %v1068
    %1400 = vmatprep.subr.bf16.mxu0 %v1065
    %1401 = vmatpush2.bf16.msra.mxu0 %v1064
    %1402 = vmatprep.mubr.bf16.mxu0 %v113
    %1403 = vmatmul.mubr.bf16.gmra.mxu0 %v112
    %v1404 = vpop.f32.mrf.mxu0
    %v1405 = vadd.f32 %v1364, %v1404
    %v1406 = vpop.f32.mrf.mxu0
    %v1407 = vadd.f32 %v1366, %v1406
    %v1408 = vpop.f32.mrf.mxu0
    %v1409 = vpop.f32.mrf.mxu0
    %1410 = vdwg.mxu0
    %1411 = vmatprep.subr.bf16.mxu0 %v935
    %1412 = vmatpush1.bf16.msra.mxu0 %v934
    %1413 = vmatprep.subr.bf16.mxu0 %v931
    %1414 = vmatpush1.bf16.msra.mxu0 %v930
    %1415 = vmatprep.subr.bf16.mxu0 %v927
    %1416 = vmatpush1.bf16.msra.mxu0 %v926
    %1417 = vmatprep.subr.bf16.mxu0 %v923
    %1418 = vmatpush1.bf16.msra.mxu0 %v922
    %1419 = vmatprep.subr.bf16.mxu0 %v919
    %1420 = vmatpush1.bf16.msra.mxu0 %v918
    %1421 = vmatprep.subr.bf16.mxu0 %v915
    %1422 = vmatpush1.bf16.msra.mxu0 %v914
    %1423 = vmatprep.subr.bf16.mxu0 %v911
    %1424 = vmatpush1.bf16.msra.mxu0 %v910
    %1425 = vmatprep.subr.bf16.mxu0 %v907
    %1426 = vmatpush1.bf16.msra.mxu0 %v906
    %1427 = vmatprep.subr.bf16.mxu0 %v967
    %1428 = vmatpush2.bf16.msra.mxu0 %v966
    %1429 = vmatprep.subr.bf16.mxu0 %v963
    %1430 = vmatpush2.bf16.msra.mxu0 %v962
    %1431 = vmatprep.subr.bf16.mxu0 %v959
    %1432 = vmatpush2.bf16.msra.mxu0 %v958
    %1433 = vmatprep.subr.bf16.mxu0 %v955
    %1434 = vmatpush2.bf16.msra.mxu0 %v954
    %1435 = vmatprep.subr.bf16.mxu0 %v951
    %1436 = vmatpush2.bf16.msra.mxu0 %v950
    %1437 = vmatprep.subr.bf16.mxu0 %v947
    %1438 = vmatpush2.bf16.msra.mxu0 %v946
    %1439 = vmatprep.subr.bf16.mxu0 %v943
    %1440 = vmatpush2.bf16.msra.mxu0 %v942
    %1441 = vmatprep.subr.bf16.mxu0 %v939
    %1442 = vmatpush2.bf16.msra.mxu0 %v938
    %1443 = vmatprep.mubr.bf16.mxu0 %v109
    %1444 = vmatmul.mubr.bf16.gmra.mxu0 %v108
    %v1445 = vpop.f32.mrf.mxu0
    %v1446 = vadd.f32 %v319, %v1445
    %v1447 = vpop.f32.mrf.mxu0
    %v1448 = vadd.f32 %v323, %v1447
    %v1449 = vpop.f32.mrf.mxu0
    %v1450 = vpop.f32.mrf.mxu0
    %1451 = vdwg.mxu0
    %1452 = vmatprep.subr.bf16.mxu0 %v999
    %1453 = vmatpush1.bf16.msra.mxu0 %v998
    %1454 = vmatprep.subr.bf16.mxu0 %v995
    %1455 = vmatpush1.bf16.msra.mxu0 %v994
    %1456 = vmatprep.subr.bf16.mxu0 %v991
    %1457 = vmatpush1.bf16.msra.mxu0 %v990
    %1458 = vmatprep.subr.bf16.mxu0 %v987
    %1459 = vmatpush1.bf16.msra.mxu0 %v986
    %1460 = vmatprep.subr.bf16.mxu0 %v983
    %1461 = vmatpush1.bf16.msra.mxu0 %v982
    %1462 = vmatprep.subr.bf16.mxu0 %v979
    %1463 = vmatpush1.bf16.msra.mxu0 %v978
    %1464 = vmatprep.subr.bf16.mxu0 %v975
    %1465 = vmatpush1.bf16.msra.mxu0 %v974
    %1466 = vmatprep.subr.bf16.mxu0 %v971
    %1467 = vmatpush1.bf16.msra.mxu0 %v970
    %1468 = vmatprep.subr.bf16.mxu0 %v1031
    %1469 = vmatpush2.bf16.msra.mxu0 %v1030
    %1470 = vmatprep.subr.bf16.mxu0 %v1027
    %1471 = vmatpush2.bf16.msra.mxu0 %v1026
    %1472 = vmatprep.subr.bf16.mxu0 %v1023
    %1473 = vmatpush2.bf16.msra.mxu0 %v1022
    %1474 = vmatprep.subr.bf16.mxu0 %v1019
    %1475 = vmatpush2.bf16.msra.mxu0 %v1018
    %1476 = vmatprep.subr.bf16.mxu0 %v1015
    %1477 = vmatpush2.bf16.msra.mxu0 %v1014
    %1478 = vmatprep.subr.bf16.mxu0 %v1011
    %1479 = vmatpush2.bf16.msra.mxu0 %v1010
    %1480 = vmatprep.subr.bf16.mxu0 %v1007
    %1481 = vmatpush2.bf16.msra.mxu0 %v1006
    %1482 = vmatprep.subr.bf16.mxu0 %v1003
    %1483 = vmatpush2.bf16.msra.mxu0 %v1002
    %1484 = vmatprep.mubr.bf16.mxu0 %v111
    %1485 = vmatmul.mubr.bf16.gmra.mxu0 %v110
    %v1486 = vpop.f32.mrf.mxu0
    %v1487 = vadd.f32 %v1446, %v1486
    %v1488 = vpop.f32.mrf.mxu0
    %v1489 = vadd.f32 %v1448, %v1488
    %v1490 = vpop.f32.mrf.mxu0
    %v1491 = vpop.f32.mrf.mxu0
    %1492 = vdwg.mxu0
    %1493 = vmatprep.subr.bf16.mxu0 %v1063
    %1494 = vmatpush1.bf16.msra.mxu0 %v1062
    %1495 = vmatprep.subr.bf16.mxu0 %v1059
    %1496 = vmatpush1.bf16.msra.mxu0 %v1058
    %1497 = vmatprep.subr.bf16.mxu0 %v1055
    %1498 = vmatpush1.bf16.msra.mxu0 %v1054
    %1499 = vmatprep.subr.bf16.mxu0 %v1051
    %1500 = vmatpush1.bf16.msra.mxu0 %v1050
    %1501 = vmatprep.subr.bf16.mxu0 %v1047
    %1502 = vmatpush1.bf16.msra.mxu0 %v1046
    %1503 = vmatprep.subr.bf16.mxu0 %v1043
    %1504 = vmatpush1.bf16.msra.mxu0 %v1042
    %1505 = vmatprep.subr.bf16.mxu0 %v1039
    %1506 = vmatpush1.bf16.msra.mxu0 %v1038
    %1507 = vmatprep.subr.bf16.mxu0 %v1035
    %1508 = vmatpush1.bf16.msra.mxu0 %v1034
    %1509 = vmatprep.subr.bf16.mxu0 %v1095
    %1510 = vmatpush2.bf16.msra.mxu0 %v1094
    %1511 = vmatprep.subr.bf16.mxu0 %v1091
    %1512 = vmatpush2.bf16.msra.mxu0 %v1090
    %1513 = vmatprep.subr.bf16.mxu0 %v1087
    %1514 = vmatpush2.bf16.msra.mxu0 %v1086
    %1515 = vmatprep.subr.bf16.mxu0 %v1083
    %1516 = vmatpush2.bf16.msra.mxu0 %v1082
    %1517 = vmatprep.subr.bf16.mxu0 %v1079
    %1518 = vmatpush2.bf16.msra.mxu0 %v1078
    %1519 = vmatprep.subr.bf16.mxu0 %v1075
    %1520 = vmatpush2.bf16.msra.mxu0 %v1074
    %1521 = vmatprep.subr.bf16.mxu0 %v1071
    %1522 = vmatpush2.bf16.msra.mxu0 %v1070
    %1523 = vmatprep.subr.bf16.mxu0 %v1067
    %1524 = vmatpush2.bf16.msra.mxu0 %v1066
    %1525 = vmatprep.mubr.bf16.mxu0 %v113
    %1526 = vmatmul.mubr.bf16.gmra.mxu0 %v112
    %v1527 = vpop.f32.mrf.mxu0
    %v1528 = vadd.f32 %v1487, %v1527
    %v1529 = vpop.f32.mrf.mxu0
    %v1530 = vadd.f32 %v1489, %v1529
    %v1531 = vpop.f32.mrf.mxu0
    %v1532 = vpop.f32.mrf.mxu0
    %1533 = vdwg.mxu0
    %v1534 = vmax.f32 %v1405, 0.0
    %v1535 = vmax.f32 %v1407, 0.0
    %v1536 = vmax.f32 %v1528, 0.0
    %v1537 = vmax.f32 %v1530, 0.0
    %v1538 = vpack.c.bf16 %v1534, %v1534
    %v1539 = vpack.c.bf16 %v1535, %v1535
    %v1540 = vpack.c.bf16 %v1536, %v1536
    %v1541 = vpack.c.bf16 %v1537, %v1537
    %v1542 = vld [vmem:[#allocation8] sm:$0xf]
    %v1543 = vld [vmem:[#allocation8 + $0x4] sm:$0xf]
    %v1544 = vld [vmem:[#allocation8 + $0x8] sm:$0xf]
    %v1545 = vld [vmem:[#allocation8 + $0xc] sm:$0xf]
    %v1546 = vld [vmem:[#allocation8 + $0x10] sm:$0xf]
    %v1547 = vld [vmem:[#allocation8 + $0x14] sm:$0xf]
    %v1548 = vld [vmem:[#allocation8 + $0x18] sm:$0xf]
    %v1549 = vld [vmem:[#allocation8 + $0x1c] sm:$0xf]
    %v1550 = vld [vmem:[#allocation8 + $0x20] sm:$0xf]
    %v1551 = vld [vmem:[#allocation8 + $0x24] sm:$0xf]
    %v1552 = vld [vmem:[#allocation8 + $0x28] sm:$0xf]
    %v1553 = vld [vmem:[#allocation8 + $0x2c] sm:$0xf]
    %v1554 = vld [vmem:[#allocation8 + $0x30] sm:$0xf]
    %v1555 = vld [vmem:[#allocation8 + $0x34] sm:$0xf]
    %v1556 = vld [vmem:[#allocation8 + $0x38] sm:$0xf]
    %v1557 = vld [vmem:[#allocation8 + $0x3c] sm:$0xf]
    %v1558 = vld [vmem:[#allocation8 + $0x40] sm:$0xf]
    %v1559 = vld [vmem:[#allocation8 + $0x44] sm:$0xf]
    %v1560 = vld [vmem:[#allocation8 + $0x48] sm:$0xf]
    %v1561 = vld [vmem:[#allocation8 + $0x4c] sm:$0xf]
    %v1562 = vld [vmem:[#allocation8 + $0x50] sm:$0xf]
    %v1563 = vld [vmem:[#allocation8 + $0x54] sm:$0xf]
    %v1564 = vld [vmem:[#allocation8 + $0x58] sm:$0xf]
    %v1565 = vld [vmem:[#allocation8 + $0x5c] sm:$0xf]
    %v1566 = vld [vmem:[#allocation8 + $0x60] sm:$0xf]
    %v1567 = vld [vmem:[#allocation8 + $0x64] sm:$0xf]
    %v1568 = vld [vmem:[#allocation8 + $0x68] sm:$0xf]
    %v1569 = vld [vmem:[#allocation8 + $0x6c] sm:$0xf]
    %v1570 = vld [vmem:[#allocation8 + $0x70] sm:$0xf]
    %v1571 = vld [vmem:[#allocation8 + $0x74] sm:$0xf]
    %v1572 = vld [vmem:[#allocation8 + $0x78] sm:$0xf]
    %v1573 = vld [vmem:[#allocation8 + $0x7c] sm:$0xf]
    %v1574 = vld [vmem:[#allocation8 + $0x80] sm:$0xf]
    %v1575 = vld [vmem:[#allocation8 + $0x84] sm:$0xf]
    %v1576 = vld [vmem:[#allocation8 + $0x88] sm:$0xf]
    %v1577 = vld [vmem:[#allocation8 + $0x8c] sm:$0xf]
    %v1578 = vld [vmem:[#allocation8 + $0x90] sm:$0xf]
    %v1579 = vld [vmem:[#allocation8 + $0x94] sm:$0xf]
    %v1580 = vld [vmem:[#allocation8 + $0x98] sm:$0xf]
    %v1581 = vld [vmem:[#allocation8 + $0x9c] sm:$0xf]
    %v1582 = vld [vmem:[#allocation8 + $0xa0] sm:$0xf]
    %v1583 = vld [vmem:[#allocation8 + $0xa4] sm:$0xf]
    %v1584 = vld [vmem:[#allocation8 + $0xa8] sm:$0xf]
    %v1585 = vld [vmem:[#allocation8 + $0xac] sm:$0xf]
    %v1586 = vld [vmem:[#allocation8 + $0xb0] sm:$0xf]
    %v1587 = vld [vmem:[#allocation8 + $0xb4] sm:$0xf]
    %v1588 = vld [vmem:[#allocation8 + $0xb8] sm:$0xf]
    %v1589 = vld [vmem:[#allocation8 + $0xbc] sm:$0xf]
    %v1590 = vld [vmem:[#allocation8 + $0xc0] sm:$0xf]
    %v1591 = vld [vmem:[#allocation8 + $0xc4] sm:$0xf]
    %v1592 = vld [vmem:[#allocation8 + $0xc8] sm:$0xf]
    %v1593 = vld [vmem:[#allocation8 + $0xcc] sm:$0xf]
    %v1594 = vld [vmem:[#allocation8 + $0xd0] sm:$0xf]
    %v1595 = vld [vmem:[#allocation8 + $0xd4] sm:$0xf]
    %v1596 = vld [vmem:[#allocation8 + $0xd8] sm:$0xf]
    %v1597 = vld [vmem:[#allocation8 + $0xdc] sm:$0xf]
    %v1598 = vld [vmem:[#allocation8 + $0xe0] sm:$0xf]
    %v1599 = vld [vmem:[#allocation8 + $0xe4] sm:$0xf]
    %v1600 = vld [vmem:[#allocation8 + $0xe8] sm:$0xf]
    %v1601 = vld [vmem:[#allocation8 + $0xec] sm:$0xf]
    %v1602 = vld [vmem:[#allocation8 + $0xf0] sm:$0xf]
    %v1603 = vld [vmem:[#allocation8 + $0xf4] sm:$0xf]
    %v1604 = vld [vmem:[#allocation8 + $0xf8] sm:$0xf]
    %v1605 = vld [vmem:[#allocation8 + $0xfc] sm:$0xf]
    %v1606 = vld [vmem:[%s4] sm:$0x1]
    %v1608 = vlaneseq
    %v1609 = vshrl.u32 %v1608, 7
    %v1610 = vsub.s32 0, %v1609
    %v1611 = vrot.slane %v1606, %v1610
    %v1677 = vunpack.c.l.b16 %v1542
    %v1678 = vunpack.c.l.b16 %v1543
    %v1679 = vunpack.c.l.b16 %v1544
    %v1680 = vunpack.c.l.b16 %v1545
    %v1681 = vunpack.c.l.b16 %v1546
    %v1682 = vunpack.c.l.b16 %v1547
    %v1683 = vunpack.c.l.b16 %v1548
    %v1684 = vunpack.c.l.b16 %v1549
    %v1685 = vunpack.c.l.b16 %v1550
    %v1686 = vunpack.c.l.b16 %v1551
    %v1687 = vunpack.c.l.b16 %v1552
    %v1688 = vunpack.c.l.b16 %v1553
    %v1689 = vunpack.c.l.b16 %v1554
    %v1690 = vunpack.c.l.b16 %v1555
    %v1691 = vunpack.c.l.b16 %v1556
    %v1692 = vunpack.c.l.b16 %v1557
    %v1693 = vunpack.c.l.b16 %v1558
    %v1694 = vunpack.c.l.b16 %v1559
    %v1695 = vunpack.c.l.b16 %v1560
    %v1696 = vunpack.c.l.b16 %v1561
    %v1697 = vunpack.c.l.b16 %v1562
    %v1698 = vunpack.c.l.b16 %v1563
    %v1699 = vunpack.c.l.b16 %v1564
    %v1700 = vunpack.c.l.b16 %v1565
    %v1701 = vunpack.c.l.b16 %v1566
    %v1702 = vunpack.c.l.b16 %v1567
    %v1703 = vunpack.c.l.b16 %v1568
    %v1704 = vunpack.c.l.b16 %v1569
    %v1705 = vunpack.c.l.b16 %v1570
    %v1706 = vunpack.c.l.b16 %v1571
    %v1707 = vunpack.c.l.b16 %v1572
    %v1708 = vunpack.c.l.b16 %v1573
    %v1709 = vunpack.c.l.b16 %v1574
    %v1710 = vunpack.c.l.b16 %v1575
    %v1711 = vunpack.c.l.b16 %v1576
    %v1712 = vunpack.c.l.b16 %v1577
    %v1713 = vunpack.c.l.b16 %v1578
    %v1714 = vunpack.c.l.b16 %v1579
    %v1715 = vunpack.c.l.b16 %v1580
    %v1716 = vunpack.c.l.b16 %v1581
    %v1717 = vunpack.c.l.b16 %v1582
    %v1718 = vunpack.c.l.b16 %v1583
    %v1719 = vunpack.c.l.b16 %v1584
    %v1720 = vunpack.c.l.b16 %v1585
    %v1721 = vunpack.c.l.b16 %v1586
    %v1722 = vunpack.c.l.b16 %v1587
    %v1723 = vunpack.c.l.b16 %v1588
    %v1724 = vunpack.c.l.b16 %v1589
    %v1725 = vunpack.c.l.b16 %v1590
    %v1726 = vunpack.c.l.b16 %v1591
    %v1727 = vunpack.c.l.b16 %v1592
    %v1728 = vunpack.c.l.b16 %v1593
    %v1729 = vunpack.c.l.b16 %v1594
    %v1730 = vunpack.c.l.b16 %v1595
    %v1731 = vunpack.c.l.b16 %v1596
    %v1732 = vunpack.c.l.b16 %v1597
    %v1733 = vunpack.c.l.b16 %v1598
    %v1734 = vunpack.c.l.b16 %v1599
    %v1735 = vunpack.c.l.b16 %v1600
    %v1736 = vunpack.c.l.b16 %v1601
    %v1737 = vunpack.c.l.b16 %v1602
    %v1738 = vunpack.c.l.b16 %v1603
    %v1739 = vunpack.c.l.b16 %v1604
    %v1740 = vunpack.c.l.b16 %v1605
    %v1741 = vpack.c.b16 %v1678, %v1677
    %v1742 = vpack.c.b16 %v1680, %v1679
    %v1743 = vpack.c.b16 %v1682, %v1681
    %v1744 = vpack.c.b16 %v1684, %v1683
    %v1745 = vpack.c.b16 %v1686, %v1685
    %v1746 = vpack.c.b16 %v1688, %v1687
    %v1747 = vpack.c.b16 %v1690, %v1689
    %v1748 = vpack.c.b16 %v1692, %v1691
    %v1749 = vpack.c.b16 %v1694, %v1693
    %v1750 = vpack.c.b16 %v1696, %v1695
    %v1751 = vpack.c.b16 %v1698, %v1697
    %v1752 = vpack.c.b16 %v1700, %v1699
    %v1753 = vpack.c.b16 %v1702, %v1701
    %v1754 = vpack.c.b16 %v1704, %v1703
    %v1755 = vpack.c.b16 %v1706, %v1705
    %v1756 = vpack.c.b16 %v1708, %v1707
    %v1757 = vpack.c.b16 %v1710, %v1709
    %v1758 = vpack.c.b16 %v1712, %v1711
    %v1759 = vpack.c.b16 %v1714, %v1713
    %v1760 = vpack.c.b16 %v1716, %v1715
    %v1761 = vpack.c.b16 %v1718, %v1717
    %v1762 = vpack.c.b16 %v1720, %v1719
    %v1763 = vpack.c.b16 %v1722, %v1721
    %v1764 = vpack.c.b16 %v1724, %v1723
    %v1765 = vpack.c.b16 %v1726, %v1725
    %v1766 = vpack.c.b16 %v1728, %v1727
    %v1767 = vpack.c.b16 %v1730, %v1729
    %v1768 = vpack.c.b16 %v1732, %v1731
    %v1769 = vpack.c.b16 %v1734, %v1733
    %v1770 = vpack.c.b16 %v1736, %v1735
    %v1771 = vpack.c.b16 %v1738, %v1737
    %v1772 = vpack.c.b16 %v1740, %v1739
    %1805 = vmatprep.subr.bf16.mxu0 0
    %1806 = vmatpush1.bf16.msra.mxu0 %v1748
    %1807 = vmatprep.subr.bf16.mxu0 0
    %1808 = vmatpush1.bf16.msra.mxu0 %v1747
    %1809 = vmatprep.subr.bf16.mxu0 0
    %1810 = vmatpush1.bf16.msra.mxu0 %v1746
    %1811 = vmatprep.subr.bf16.mxu0 0
    %1812 = vmatpush1.bf16.msra.mxu0 %v1745
    %1813 = vmatprep.subr.bf16.mxu0 0
    %1814 = vmatpush1.bf16.msra.mxu0 %v1744
    %1815 = vmatprep.subr.bf16.mxu0 0
    %1816 = vmatpush1.bf16.msra.mxu0 %v1743
    %1817 = vmatprep.subr.bf16.mxu0 0
    %1818 = vmatpush1.bf16.msra.mxu0 %v1742
    %1819 = vmatprep.subr.bf16.mxu0 0
    %1820 = vmatpush1.bf16.msra.mxu0 %v1741
    %1821 = vmatprep.subr.bf16.mxu0 0
    %1822 = vmatpush2.bf16.msra.mxu0 %v1756
    %1823 = vmatprep.subr.bf16.mxu0 0
    %1824 = vmatpush2.bf16.msra.mxu0 %v1755
    %1825 = vmatprep.subr.bf16.mxu0 0
    %1826 = vmatpush2.bf16.msra.mxu0 %v1754
    %1827 = vmatprep.subr.bf16.mxu0 0
    %1828 = vmatpush2.bf16.msra.mxu0 %v1753
    %1829 = vmatprep.subr.bf16.mxu0 0
    %1830 = vmatpush2.bf16.msra.mxu0 %v1752
    %1831 = vmatprep.subr.bf16.mxu0 0
    %1832 = vmatpush2.bf16.msra.mxu0 %v1751
    %1833 = vmatprep.subr.bf16.mxu0 0
    %1834 = vmatpush2.bf16.msra.mxu0 %v1750
    %1835 = vmatprep.subr.bf16.mxu0 0
    %1836 = vmatpush2.bf16.msra.mxu0 %v1749
    %1837 = vmatprep.mubr.bf16.mxu0 %v1539
    %1838 = vmatmul.mubr.bf16.gmra.mxu0 %v1538
    %v1839 = vpop.f32.mrf.mxu0
    %v1840 = vadd.f32 %v1611, %v1839
    %v1841 = vpop.f32.mrf.mxu0
    %v1842 = vpop.f32.mrf.mxu0
    %v1843 = vpop.f32.mrf.mxu0
    %1844 = vdwg.mxu0
    %1845 = vmatprep.subr.bf16.mxu0 0
    %1846 = vmatpush1.bf16.msra.mxu0 %v1764
    %1847 = vmatprep.subr.bf16.mxu0 0
    %1848 = vmatpush1.bf16.msra.mxu0 %v1763
    %1849 = vmatprep.subr.bf16.mxu0 0
    %1850 = vmatpush1.bf16.msra.mxu0 %v1762
    %1851 = vmatprep.subr.bf16.mxu0 0
    %1852 = vmatpush1.bf16.msra.mxu0 %v1761
    %1853 = vmatprep.subr.bf16.mxu0 0
    %1854 = vmatpush1.bf16.msra.mxu0 %v1760
    %1855 = vmatprep.subr.bf16.mxu0 0
    %1856 = vmatpush1.bf16.msra.mxu0 %v1759
    %1857 = vmatprep.subr.bf16.mxu0 0
    %1858 = vmatpush1.bf16.msra.mxu0 %v1758
    %1859 = vmatprep.subr.bf16.mxu0 0
    %1860 = vmatpush1.bf16.msra.mxu0 %v1757
    %1861 = vmatprep.subr.bf16.mxu0 0
    %1862 = vmatpush2.bf16.msra.mxu0 %v1772
    %1863 = vmatprep.subr.bf16.mxu0 0
    %1864 = vmatpush2.bf16.msra.mxu0 %v1771
    %1865 = vmatprep.subr.bf16.mxu0 0
    %1866 = vmatpush2.bf16.msra.mxu0 %v1770
    %1867 = vmatprep.subr.bf16.mxu0 0
    %1868 = vmatpush2.bf16.msra.mxu0 %v1769
    %1869 = vmatprep.subr.bf16.mxu0 0
    %1870 = vmatpush2.bf16.msra.mxu0 %v1768
    %1871 = vmatprep.subr.bf16.mxu0 0
    %1872 = vmatpush2.bf16.msra.mxu0 %v1767
    %1873 = vmatprep.subr.bf16.mxu0 0
    %1874 = vmatpush2.bf16.msra.mxu0 %v1766
    %1875 = vmatprep.subr.bf16.mxu0 0
    %1876 = vmatpush2.bf16.msra.mxu0 %v1765
    %1877 = vmatprep.mubr.bf16.mxu0 %v1541
    %1878 = vmatmul.mubr.bf16.gmra.mxu0 %v1540
    %v1879 = vpop.f32.mrf.mxu0
    %v1880 = vadd.f32 %v1840, %v1879
    %v1881 = vpop.f32.mrf.mxu0
    %v1882 = vpop.f32.mrf.mxu0
    %v1883 = vpop.f32.mrf.mxu0
    %1884 = vdwg.mxu0
    %vm1885 = vcmask 1041408
    %v1886 = vsel %vm1885, %v1880, -inf
    %1887 = vmax.xlane.f32.xlu0 %v1886
    %v1888 = vpop.xlane.xlu0 %1887
    %v1889 = vsub.f32 %v1880, %v1888
    %v1890 = vmul.f32 %v1889, 1.442695
    %v1891 = vpow.pop %v1890
    %v1892 = vsel %vm1885, %v1891, 0.0
    %1893 = vadd.xlane.f32.xlu0 %v1892
    %v1894 = vpop.xlane.xlu0 %1893
    %v1895 = vlog2.pop %v1894
    %v1896 = vmul.f32 %v1895, 0.6931472
    %v1897 = vsub.f32 %v1889, %v1896
    %v1898 = vpack.c.bf16 %v1897, %v1897
    %1899 = vst [vmem:[#allocation10] sm:$0x1] %v1898
    // Predicated region
    $region38: #{tpu_custom_call.1} parent=1 // pred_check
      _
    $region39: #{tpu_custom_call.1} parent=1 // pred_check_branch
      %1901 = sbr.rel (0) target = $region41
    $region40: #{tpu_custom_call.1} parent=1 // pred_region
      %s1903 = ssub.s32 16, 16
      %1904 = vsyncadd [#allocation4], %s1903
      %s1906 = sshll.u32 [#allocation10], 4
      %s1907 = int_to_ptr.vmem [resolvable:$true] %s1906
      %1909 = dma.vmem_to_hbm [thread:$0]  %s1907, 16, %s5, [#allocation4]
    $region41: #{tpu_custom_call.1} parent=1 // pred_fallthru
      _
    // Predicated region
    $region42: #{tpu_custom_call.1} parent=1 // pred_check
      _
    $region43: #{tpu_custom_call.1} parent=1 // pred_check_branch
      %1911 = sbr.rel (0) target = $region45
    $region44: #{tpu_custom_call.1} parent=1 // pred_region
      %1912 = dma.done [#allocation4], 16
    $region45: #{tpu_custom_call.1} parent=1 // pred_fallthru
      _
    %1913 = vsyncpa [#allocation3], 1
    %1914 = vsyncpa [#allocation6], 1
    %1915 = vsyncpa [#allocation9], 1
    %1916 = vsyncpa [#allocation4], 1

</llo_original>
